<compile_context>
chip_gen: v6e
topology: v6e:2x2x1
jax: 0.10.0
libtpu: 0.0.40
codegen_flags: <defaults>
</compile_context>

<pallas_src>
import functools
from typing import NamedTuple

import jax
import jax.numpy as jnp
from jax.experimental import pallas as pl
from jax.experimental.pallas import tpu as pltpu


LABEL_PAD = 128  # lane-dense padded label dimension for the output projection


class RGConfig(NamedTuple):
    num_relations: int
    num_layers: int
    embedding_dim: int
    hidden_dim: int
    vocab_size: int
    label_size: int
    padding_idx: int


# ----------------------------------------------------------------------------
# Pallas kernel: embedding fold-in + wavefront LSTM + deferred projection.
# ----------------------------------------------------------------------------
def _make_kernel(L, T, H, B, V):
    G = 4 * H * L        # packed gate width (all layers side by side)
    V2 = 2 * V           # stacked [input-vocab | relation-vocab] one-hot axis

    def kernel(ids_ref, state0_ref, slab_ref, wrec_ref, wout_ref,
               logits_ref, hcn_ref, htop_ref):
        # ids_ref    (T*B, 2) int32 : col0 = input token id, col1 = relation id + V
        # state0_ref (2L, B, H)     : rows 0:L = h0, rows L:2L = c0
        # slab_ref   (2V+3, G)      : [P_in_pad; P_rel_pad; bias; scale; offset]
        # wrec_ref   (L*H, G)       : block-structured recurrent/input weights
        # wout_ref   (H+1, 128)     : [W_out^T padded; b_out padded]
        # logits_ref (T*B, 128), hcn_ref (2L, B, H), htop_ref (T*B, H) scratch

        # ---- layer-0 pre-gates for all steps via one-hot matmul (one MXU push)
        ids = ids_ref[...]                                          # (T*B, 2)
        iota = jax.lax.broadcasted_iota(jnp.int32, (T * B, V2), 1)
        onehot = ((iota == ids[:, 0:1]) | (iota == ids[:, 1:2])).astype(jnp.float32)

        p_emb = slab_ref[0:V2, :]                                   # (2V, G)
        bias = slab_ref[V2:V2 + 1, :]                               # (1, G)
        scale = slab_ref[V2 + 1:V2 + 2, :]                          # (1, G)
        offset = slab_ref[V2 + 2:V2 + 3, :]                         # (1, G)

        pre = jnp.dot(onehot, p_emb, preferred_element_type=jnp.float32) + bias

        # ---- hoist weight loads / broadcasts out of the stage loop
        w_rows = [wrec_ref[l * H:(l + 1) * H, :] for l in range(L)]  # each (H, G)
        scale_b = jnp.broadcast_to(scale, (B, G))
        offset_b = jnp.broadcast_to(offset, (B, G))

        # recurrent state lives in vregs
        h = [state0_ref[l] for l in range(L)]                        # (B, H)
        c = [state0_ref[L + l] for l in range(L)]

        # ---- wavefront: at stage s, layer l handles time t = s - l
        for s in range(T + L - 1):
            t0 = min(s, T - 1)
            gates = pre[t0 * B:(t0 + 1) * B, :]                      # (B, G)
            for l in range(L):
                gates = gates + jnp.dot(h[l], w_rows[l],
                                        preferred_element_type=jnp.float32)
            # one EUP pass over all layers' gates; recover sigmoid/tanh via FMA
            tg = jnp.tanh(gates)
            act = tg * scale_b + offset_b
            for l in range(L):
                t = s - l
                if 0 <= t <= T - 1:
                    base = 4 * H * l
                    i_g = act[:, base + 0 * H: base + 1 * H]
                    f_g = act[:, base + 1 * H: base + 2 * H]
                    g_g = act[:, base + 2 * H: base + 3 * H]
                    o_g = act[:, base + 3 * H: base + 4 * H]
                    c[l] = f_g * c[l] + i_g * g_g
                    h[l] = o_g * jnp.tanh(c[l])
                    if l == L - 1:
                        htop_ref[t * B:(t + 1) * B, :] = h[l]

        # ---- deferred lane-dense output projection: one (T*B,H)@(H,128) GEMM
        w_out = wout_ref[0:H, :]
        b_out = wout_ref[H:H + 1, :]
        logits_ref[...] = (
            jnp.dot(htop_ref[...], w_out, preferred_element_type=jnp.float32) + b_out
        )

        for l in range(L):
            hcn_ref[l] = h[l]
            hcn_ref[L + l] = c[l]

    return kernel


# ----------------------------------------------------------------------------
# Init-time parameter creation (PyTorch-default init) and one-time packing.
# ----------------------------------------------------------------------------
def init_rule_generator_params(key, cfg: RGConfig):
    V, E, H, L = cfg.vocab_size, cfg.embedding_dim, cfg.hidden_dim, cfg.num_layers
    keys = jax.random.split(key, 3 + 4 * L)
    k = 0

    emb = jax.random.normal(keys[k], (V, E), jnp.float32); k += 1
    emb = emb.at[cfg.padding_idx].set(0.0)

    bound = 1.0 / jnp.sqrt(float(H))
    layers = []
    for layer in range(L):
        in_size = 2 * E if layer == 0 else H
        w_ih = jax.random.uniform(keys[k], (4 * H, in_size), jnp.float32, -bound, bound); k += 1
        w_hh = jax.random.uniform(keys[k], (4 * H, H), jnp.float32, -bound, bound); k += 1
        b_ih = jax.random.uniform(keys[k], (4 * H,), jnp.float32, -bound, bound); k += 1
        b_hh = jax.random.uniform(keys[k], (4 * H,), jnp.float32, -bound, bound); k += 1
        layers.append((w_ih, w_hh, b_ih, b_hh))

    w_out = jax.random.uniform(keys[k], (cfg.label_size, H), jnp.float32, -bound, bound); k += 1
    b_out = jax.random.uniform(keys[k], (cfg.label_size,), jnp.float32, -bound, bound); k += 1

    return {"embedding": emb, "layers": layers, "w_out": w_out, "b_out": b_out}


def pack_rule_generator_params(raw, cfg: RGConfig):
    """One-time packing (off the per-call path)."""
    V, E, H, L = cfg.vocab_size, cfg.embedding_dim, cfg.hidden_dim, cfg.num_layers
    G = 4 * H * L

    # sigmoid-as-tanh gate prescale: i/f/o columns halved; g untouched
    half, one, zero = (jnp.full((H,), 0.5, jnp.float32),
                       jnp.ones((H,), jnp.float32),
                       jnp.zeros((H,), jnp.float32))
    block_pre = jnp.concatenate([half, half, one, half])
    block_off = jnp.concatenate([half, half, zero, half])
    gate_pre = jnp.tile(block_pre, (L,))          # (G,)  prescale + post-scale
    gate_off = jnp.tile(block_off, (L,))          # (G,)  post-offset

    emb = raw["embedding"]
    w_ih0 = raw["layers"][0][0]                   # (4H, 2E)

    # fold embedding into layer-0 input weights
    p_in = emb @ w_ih0[:, :E].T                   # (V, 4H)
    p_rel = emb @ w_ih0[:, E:].T                  # (V, 4H)
    p_in_pad = jnp.zeros((V, G), jnp.float32).at[:, :4 * H].set(p_in)
    p_rel_pad = jnp.zeros((V, G), jnp.float32).at[:, :4 * H].set(p_rel)

    bias = jnp.zeros((G,), jnp.float32)
    wrec = jnp.zeros((L * H, G), jnp.float32)
    for l in range(L):
        w_ih, w_hh, b_ih, b_hh = raw["layers"][l]
        bias = bias.at[4 * H * l:4 * H * (l + 1)].set(b_ih + b_hh)
        wrec = wrec.at[l * H:(l + 1) * H, 4 * H * l:4 * H * (l + 1)].set(w_hh.T)
        if l + 1 < L:
            w_ih_next = raw["layers"][l + 1][0]   # (4H, H)
            wrec = wrec.at[l * H:(l + 1) * H,
                           4 * H * (l + 1):4 * H * (l + 2)].set(w_ih_next.T)

    # apply the gate prescale columnwise to every gate-producing matrix
    p_in_pad = p_in_pad * gate_pre
    p_rel_pad = p_rel_pad * gate_pre
    bias = bias * gate_pre
    wrec = wrec * gate_pre

    slab = jnp.concatenate(
        [p_in_pad, p_rel_pad, bias[None, :], gate_pre[None, :], gate_off[None, :]],
        axis=0).astype(jnp.float32)               # (2V+3, G)

    wout_slab = jnp.zeros((H + 1, LABEL_PAD), jnp.float32)
    wout_slab = wout_slab.at[:H, :cfg.label_size].set(raw["w_out"].T)
    wout_slab = wout_slab.at[H, :cfg.label_size].set(raw["b_out"])

    return {"slab": slab, "wrec": wrec, "wout": wout_slab}


# ----------------------------------------------------------------------------
# Jitted forward wrapper (glue fuses; one pallas_call inside).
# ----------------------------------------------------------------------------
def make_rule_generator_forward(cfg: RGConfig):
    L, H, V, Lab = cfg.num_layers, cfg.hidden_dim, cfg.vocab_size, cfg.label_size

    def _forward(packed, inputs, relation, h0, c0):
        B, T = inputs.shape
        ids_in = jnp.transpose(inputs.astype(jnp.int32)).reshape(T * B)       # t*B+b
        ids_rel = jnp.tile(relation.astype(jnp.int32), (T,)) + V              # shifted
        ids = jnp.stack([ids_in, ids_rel], axis=1)                            # (T*B, 2)
        state0 = jnp.concatenate([h0, c0], axis=0)                            # (2L,B,H)

        kernel = _make_kernel(L, T, H, B, V)
        vmem = pltpu.MemorySpace.VMEM
        out_shapes = (
            jax.ShapeDtypeStruct((T * B, LABEL_PAD), jnp.float32),
            jax.ShapeDtypeStruct((2 * L, B, H), jnp.float32),
        )
        logits_flat, hcn = pl.pallas_call(
            kernel,
            out_shape=out_shapes,
            in_specs=[pl.BlockSpec(memory_space=vmem)] * 5,
            out_specs=tuple(pl.BlockSpec(memory_space=vmem) for _ in out_shapes),
            scratch_shapes=[pltpu.VMEM((T * B, H), jnp.float32)],
        )(ids, state0, packed["slab"], packed["wrec"], packed["wout"])

        logits = logits_flat[:, :Lab].reshape(T, B, Lab).transpose(1, 0, 2)   # (B,T,L)
        return logits, (hcn[:L], hcn[L:])

    return jax.jit(_forward)


# ----------------------------------------------------------------------------
# Pure-JAX reference (same math, no Pallas) for correctness check.
# ----------------------------------------------------------------------------
def rule_generator_forward_ref(raw, cfg: RGConfig, inputs, relation, hidden):
    emb = raw["embedding"]
    H, L = cfg.hidden_dim, cfg.num_layers
    e_in = jnp.take(emb, inputs, axis=0)
    e_rel = jnp.broadcast_to(jnp.take(emb, relation, axis=0)[:, None, :], e_in.shape)
    x = jnp.concatenate([e_in, e_rel], axis=-1)                # (B, T, 2E)
    h0, c0 = hidden
    B, T, _ = x.shape

    h = [h0[l] for l in range(L)]
    c = [c0[l] for l in range(L)]
    logits_list = []
    for t in range(T):
        inp = x[:, t, :]
        for l, (w_ih, w_hh, b_ih, b_hh) in enumerate(raw["layers"]):
            gates = inp @ w_ih.T + h[l] @ w_hh.T + b_ih + b_hh
            i_g = jax.nn.sigmoid(gates[:, 0 * H:1 * H])
            f_g = jax.nn.sigmoid(gates[:, 1 * H:2 * H])
            g_g = jnp.tanh(gates[:, 2 * H:3 * H])
            o_g = jax.nn.sigmoid(gates[:, 3 * H:4 * H])
            c[l] = f_g * c[l] + i_g * g_g
            h[l] = o_g * jnp.tanh(c[l])
            inp = h[l]
        logits_list.append(inp @ raw["w_out"].T + raw["b_out"])
    logits = jnp.stack(logits_list, axis=1)
    return logits, (jnp.stack(h, axis=0), jnp.stack(c, axis=0))


# ----------------------------------------------------------------------------
if __name__ == "__main__":
    num_relations = 6
    num_layers = 2
    embedding_dim = 16
    hidden_dim = 32
    batch = 2
    seq_len = 8

    cfg = RGConfig(
        num_relations=num_relations,
        num_layers=num_layers,
        embedding_dim=embedding_dim,
        hidden_dim=hidden_dim,
        vocab_size=num_relations + 2,
        label_size=num_relations + 1,
        padding_idx=num_relations + 1,
    )

    key = jax.random.PRNGKey(0)
    k_params, k_inp, k_rel = jax.random.split(key, 3)

    raw_params = init_rule_generator_params(k_params, cfg)
    packed = pack_rule_generator_params(raw_params, cfg)      # one-time packing
    forward = make_rule_generator_forward(cfg)                 # jitted

    inputs = jax.random.randint(k_inp, (batch, seq_len), 0, cfg.vocab_size,
                                dtype=jnp.int32)
    relation = jax.random.randint(k_rel, (batch,), 0, num_relations, dtype=jnp.int32)

    # zero_state
    h0 = jnp.zeros((num_layers, batch, hidden_dim), jnp.float32)
    c0 = jnp.zeros((num_layers, batch, hidden_dim), jnp.float32)

    logits, (h_n, c_n) = forward(packed, inputs, relation, h0, c0)
    logits = jax.block_until_ready(logits)
    h_n = jax.block_until_ready(h_n)
    c_n = jax.block_until_ready(c_n)

    # Correctness check against pure-JAX reference.
    logits_ref, (h_ref, c_ref) = rule_generator_forward_ref(
        raw_params, cfg, inputs, relation, (h0, c0))
    assert logits.shape == (batch, seq_len, cfg.label_size)
    assert h_n.shape == (num_layers, batch, hidden_dim)
    assert c_n.shape == (num_layers, batch, hidden_dim)
    assert jnp.allclose(logits, logits_ref, atol=1e-4, rtol=1e-4)
    assert jnp.allclose(h_n, h_ref, atol=1e-4, rtol=1e-4)
    assert jnp.allclose(c_n, c_ref, atol=1e-4, rtol=1e-4)

    print("KERNEL_OK")
</pallas_src>

<mosaic_0001>
module attributes {stable_mosaic.version = 11 : i64} {
  func.func @kernel(%arg0: memref<16x2xi32, #tpu.memory_space<vmem>>, %arg1: memref<4x2x32xf32, #tpu.memory_space<vmem>>, %arg2: memref<19x256xf32, #tpu.memory_space<vmem>>, %arg3: memref<64x256xf32, #tpu.memory_space<vmem>>, %arg4: memref<33x128xf32, #tpu.memory_space<vmem>>, %arg5: memref<16x128xf32, #tpu.memory_space<vmem>>, %arg6: memref<4x2x32xf32, #tpu.memory_space<vmem>>, %arg7: memref<16x32xf32, #tpu.memory_space<vmem>>) attributes {dimension_semantics = [], scalar_prefetch = 0 : i64, scratch_operands = 1 : i64, tpu.core_type = #tpu.core_type<tc>} {
    %c0 = arith.constant 0 : index
    %c0_0 = arith.constant 0 : index
    %0 = vector.load %arg0[%c0, %c0_0] : memref<16x2xi32, #tpu.memory_space<vmem>>, vector<16x2xi32>
    %1 = tpu.iota {dimensions = array<i32: 1>} : vector<16x16xi32>
    %2 = vector.extract_strided_slice %0 {offsets = [0, 0], sizes = [16, 1], strides = [1, 1]} : vector<16x2xi32> to vector<16x1xi32>
    %3 = vector.broadcast %2 : vector<16x1xi32> to vector<16x16xi32>
    %4 = arith.cmpi eq, %1, %3 : vector<16x16xi32>
    %5 = vector.extract_strided_slice %0 {offsets = [0, 1], sizes = [16, 1], strides = [1, 1]} : vector<16x2xi32> to vector<16x1xi32>
    %6 = vector.broadcast %5 : vector<16x1xi32> to vector<16x16xi32>
    %7 = arith.cmpi eq, %1, %6 : vector<16x16xi32>
    %8 = arith.ori %4, %7 : vector<16x16xi1>
    %9 = arith.extui %8 : vector<16x16xi1> to vector<16x16xi32>
    %10 = arith.sitofp %9 : vector<16x16xi32> to vector<16x16xf32>
    %c0_1 = arith.constant 0 : index
    %c0_2 = arith.constant 0 : index
    %11 = vector.load %arg2[%c0_1, %c0_2] : memref<19x256xf32, #tpu.memory_space<vmem>>, vector<16x256xf32>
    %c16 = arith.constant 16 : index
    %c0_3 = arith.constant 0 : index
    %12 = vector.load %arg2[%c16, %c0_3] : memref<19x256xf32, #tpu.memory_space<vmem>>, vector<1x256xf32>
    %c17 = arith.constant 17 : index
    %c0_4 = arith.constant 0 : index
    %13 = vector.load %arg2[%c17, %c0_4] : memref<19x256xf32, #tpu.memory_space<vmem>>, vector<1x256xf32>
    %c18 = arith.constant 18 : index
    %c0_5 = arith.constant 0 : index
    %14 = vector.load %arg2[%c18, %c0_5] : memref<19x256xf32, #tpu.memory_space<vmem>>, vector<1x256xf32>
    %cst = arith.constant dense<0.000000e+00> : vector<16x256xf32>
    %15 = tpu.matmul %10, %11, %cst {dimension_numbers = #tpu.dot_dimension_numbers<[1], [0], [0], [1], [0, 0, 1, 1], [], []>} : vector<16x16xf32>, vector<16x256xf32>, vector<16x256xf32> -> vector<16x256xf32>
    %16 = vector.broadcast %12 : vector<1x256xf32> to vector<16x256xf32>
    %17 = arith.addf %15, %16 : vector<16x256xf32>
    %c0_6 = arith.constant 0 : index
    %c0_7 = arith.constant 0 : index
    %18 = vector.load %arg3[%c0_6, %c0_7] : memref<64x256xf32, #tpu.memory_space<vmem>>, vector<32x256xf32>
    %c32 = arith.constant 32 : index
    %c0_8 = arith.constant 0 : index
    %19 = vector.load %arg3[%c32, %c0_8] : memref<64x256xf32, #tpu.memory_space<vmem>>, vector<32x256xf32>
    %20 = vector.shape_cast %13 : vector<1x256xf32> to vector<1x256xf32>
    %21 = vector.broadcast %20 : vector<1x256xf32> to vector<2x256xf32>
    %22 = vector.shape_cast %14 : vector<1x256xf32> to vector<1x256xf32>
    %23 = vector.broadcast %22 : vector<1x256xf32> to vector<2x256xf32>
    %c0_9 = arith.constant 0 : index
    %c0_10 = arith.constant 0 : index
    %c0_11 = arith.constant 0 : index
    %24 = vector.load %arg1[%c0_9, %c0_10, %c0_11] : memref<4x2x32xf32, #tpu.memory_space<vmem>>, vector<1x2x32xf32>
    %25 = vector.shape_cast %24 : vector<1x2x32xf32> to vector<2x32xf32>
    %c1 = arith.constant 1 : index
    %c0_12 = arith.constant 0 : index
    %c0_13 = arith.constant 0 : index
    %26 = vector.load %arg1[%c1, %c0_12, %c0_13] : memref<4x2x32xf32, #tpu.memory_space<vmem>>, vector<1x2x32xf32>
    %27 = vector.shape_cast %26 : vector<1x2x32xf32> to vector<2x32xf32>
    %c2 = arith.constant 2 : index
    %c0_14 = arith.constant 0 : index
    %c0_15 = arith.constant 0 : index
    %28 = vector.load %arg1[%c2, %c0_14, %c0_15] : memref<4x2x32xf32, #tpu.memory_space<vmem>>, vector<1x2x32xf32>
    %29 = vector.shape_cast %28 : vector<1x2x32xf32> to vector<2x32xf32>
    %c3 = arith.constant 3 : index
    %c0_16 = arith.constant 0 : index
    %c0_17 = arith.constant 0 : index
    %30 = vector.load %arg1[%c3, %c0_16, %c0_17] : memref<4x2x32xf32, #tpu.memory_space<vmem>>, vector<1x2x32xf32>
    %31 = vector.shape_cast %30 : vector<1x2x32xf32> to vector<2x32xf32>
    %32 = vector.extract_strided_slice %17 {offsets = [0, 0], sizes = [2, 256], strides = [1, 1]} : vector<16x256xf32> to vector<2x256xf32>
    %cst_18 = arith.constant dense<0.000000e+00> : vector<2x256xf32>
    %33 = tpu.matmul %25, %18, %cst_18 {dimension_numbers = #tpu.dot_dimension_numbers<[1], [0], [0], [1], [0, 0, 1, 1], [], []>} : vector<2x32xf32>, vector<32x256xf32>, vector<2x256xf32> -> vector<2x256xf32>
    %34 = arith.addf %32, %33 : vector<2x256xf32>
    %cst_19 = arith.constant dense<0.000000e+00> : vector<2x256xf32>
    %35 = tpu.matmul %27, %19, %cst_19 {dimension_numbers = #tpu.dot_dimension_numbers<[1], [0], [0], [1], [0, 0, 1, 1], [], []>} : vector<2x32xf32>, vector<32x256xf32>, vector<2x256xf32> -> vector<2x256xf32>
    %36 = arith.addf %34, %35 : vector<2x256xf32>
    %37 = math.tanh %36 : vector<2x256xf32>
    %38 = arith.mulf %37, %21 : vector<2x256xf32>
    %39 = arith.addf %38, %23 : vector<2x256xf32>
    %40 = vector.extract_strided_slice %39 {offsets = [0, 0], sizes = [2, 32], strides = [1, 1]} : vector<2x256xf32> to vector<2x32xf32>
    %41 = vector.extract_strided_slice %39 {offsets = [0, 32], sizes = [2, 32], strides = [1, 1]} : vector<2x256xf32> to vector<2x32xf32>
    %42 = vector.extract_strided_slice %39 {offsets = [0, 64], sizes = [2, 32], strides = [1, 1]} : vector<2x256xf32> to vector<2x32xf32>
    %43 = vector.extract_strided_slice %39 {offsets = [0, 96], sizes = [2, 32], strides = [1, 1]} : vector<2x256xf32> to vector<2x32xf32>
    %44 = arith.mulf %41, %29 : vector<2x32xf32>
    %45 = arith.mulf %40, %42 : vector<2x32xf32>
    %46 = arith.addf %44, %45 : vector<2x32xf32>
    %47 = math.tanh %46 : vector<2x32xf32>
    %48 = arith.mulf %43, %47 : vector<2x32xf32>
    %49 = vector.extract_strided_slice %17 {offsets = [2, 0], sizes = [2, 256], strides = [1, 1]} : vector<16x256xf32> to vector<2x256xf32>
    %cst_20 = arith.constant dense<0.000000e+00> : vector<2x256xf32>
    %50 = tpu.matmul %48, %18, %cst_20 {dimension_numbers = #tpu.dot_dimension_numbers<[1], [0], [0], [1], [0, 0, 1, 1], [], []>} : vector<2x32xf32>, vector<32x256xf32>, vector<2x256xf32> -> vector<2x256xf32>
    %51 = arith.addf %49, %50 : vector<2x256xf32>
    %cst_21 = arith.constant dense<0.000000e+00> : vector<2x256xf32>
    %52 = tpu.matmul %27, %19, %cst_21 {dimension_numbers = #tpu.dot_dimension_numbers<[1], [0], [0], [1], [0, 0, 1, 1], [], []>} : vector<2x32xf32>, vector<32x256xf32>, vector<2x256xf32> -> vector<2x256xf32>
    %53 = arith.addf %51, %52 : vector<2x256xf32>
    %54 = math.tanh %53 : vector<2x256xf32>
    %55 = arith.mulf %54, %21 : vector<2x256xf32>
    %56 = arith.addf %55, %23 : vector<2x256xf32>
    %57 = vector.extract_strided_slice %56 {offsets = [0, 0], sizes = [2, 32], strides = [1, 1]} : vector<2x256xf32> to vector<2x32xf32>
    %58 = vector.extract_strided_slice %56 {offsets = [0, 32], sizes = [2, 32], strides = [1, 1]} : vector<2x256xf32> to vector<2x32xf32>
    %59 = vector.extract_strided_slice %56 {offsets = [0, 64], sizes = [2, 32], strides = [1, 1]} : vector<2x256xf32> to vector<2x32xf32>
    %60 = vector.extract_strided_slice %56 {offsets = [0, 96], sizes = [2, 32], strides = [1, 1]} : vector<2x256xf32> to vector<2x32xf32>
    %61 = arith.mulf %58, %46 : vector<2x32xf32>
    %62 = arith.mulf %57, %59 : vector<2x32xf32>
    %63 = arith.addf %61, %62 : vector<2x32xf32>
    %64 = math.tanh %63 : vector<2x32xf32>
    %65 = arith.mulf %60, %64 : vector<2x32xf32>
    %66 = vector.extract_strided_slice %56 {offsets = [0, 128], sizes = [2, 32], strides = [1, 1]} : vector<2x256xf32> to vector<2x32xf32>
    %67 = vector.extract_strided_slice %56 {offsets = [0, 160], sizes = [2, 32], strides = [1, 1]} : vector<2x256xf32> to vector<2x32xf32>
    %68 = vector.extract_strided_slice %56 {offsets = [0, 192], sizes = [2, 32], strides = [1, 1]} : vector<2x256xf32> to vector<2x32xf32>
    %69 = vector.extract_strided_slice %56 {offsets = [0, 224], sizes = [2, 32], strides = [1, 1]} : vector<2x256xf32> to vector<2x32xf32>
    %70 = arith.mulf %67, %31 : vector<2x32xf32>
    %71 = arith.mulf %66, %68 : vector<2x32xf32>
    %72 = arith.addf %70, %71 : vector<2x32xf32>
    %73 = math.tanh %72 : vector<2x32xf32>
    %74 = arith.mulf %69, %73 : vector<2x32xf32>
    %c0_22 = arith.constant 0 : index
    %c0_23 = arith.constant 0 : index
    %75 = vector.load %arg7[%c0_22, %c0_23] : memref<16x32xf32, #tpu.memory_space<vmem>>, vector<2x32xf32>
    tpu.vector_store %arg7[%c0_22, %c0_23], %74 {strides = array<i32>} : memref<16x32xf32, #tpu.memory_space<vmem>>, vector<2x32xf32>,
    %76 = vector.extract_strided_slice %17 {offsets = [4, 0], sizes = [2, 256], strides = [1, 1]} : vector<16x256xf32> to vector<2x256xf32>
    %cst_24 = arith.constant dense<0.000000e+00> : vector<2x256xf32>
    %77 = tpu.matmul %65, %18, %cst_24 {dimension_numbers = #tpu.dot_dimension_numbers<[1], [0], [0], [1], [0, 0, 1, 1], [], []>} : vector<2x32xf32>, vector<32x256xf32>, vector<2x256xf32> -> vector<2x256xf32>
    %78 = arith.addf %76, %77 : vector<2x256xf32>
    %cst_25 = arith.constant dense<0.000000e+00> : vector<2x256xf32>
    %79 = tpu.matmul %74, %19, %cst_25 {dimension_numbers = #tpu.dot_dimension_numbers<[1], [0], [0], [1], [0, 0, 1, 1], [], []>} : vector<2x32xf32>, vector<32x256xf32>, vector<2x256xf32> -> vector<2x256xf32>
    %80 = arith.addf %78, %79 : vector<2x256xf32>
    %81 = math.tanh %80 : vector<2x256xf32>
    %82 = arith.mulf %81, %21 : vector<2x256xf32>
    %83 = arith.addf %82, %23 : vector<2x256xf32>
    %84 = vector.extract_strided_slice %83 {offsets = [0, 0], sizes = [2, 32], strides = [1, 1]} : vector<2x256xf32> to vector<2x32xf32>
    %85 = vector.extract_strided_slice %83 {offsets = [0, 32], sizes = [2, 32], strides = [1, 1]} : vector<2x256xf32> to vector<2x32xf32>
    %86 = vector.extract_strided_slice %83 {offsets = [0, 64], sizes = [2, 32], strides = [1, 1]} : vector<2x256xf32> to vector<2x32xf32>
    %87 = vector.extract_strided_slice %83 {offsets = [0, 96], sizes = [2, 32], strides = [1, 1]} : vector<2x256xf32> to vector<2x32xf32>
    %88 = arith.mulf %85, %63 : vector<2x32xf32>
    %89 = arith.mulf %84, %86 : vector<2x32xf32>
    %90 = arith.addf %88, %89 : vector<2x32xf32>
    %91 = math.tanh %90 : vector<2x32xf32>
    %92 = arith.mulf %87, %91 : vector<2x32xf32>
    %93 = vector.extract_strided_slice %83 {offsets = [0, 128], sizes = [2, 32], strides = [1, 1]} : vector<2x256xf32> to vector<2x32xf32>
    %94 = vector.extract_strided_slice %83 {offsets = [0, 160], sizes = [2, 32], strides = [1, 1]} : vector<2x256xf32> to vector<2x32xf32>
    %95 = vector.extract_strided_slice %83 {offsets = [0, 192], sizes = [2, 32], strides = [1, 1]} : vector<2x256xf32> to vector<2x32xf32>
    %96 = vector.extract_strided_slice %83 {offsets = [0, 224], sizes = [2, 32], strides = [1, 1]} : vector<2x256xf32> to vector<2x32xf32>
    %97 = arith.mulf %94, %72 : vector<2x32xf32>
    %98 = arith.mulf %93, %95 : vector<2x32xf32>
    %99 = arith.addf %97, %98 : vector<2x32xf32>
    %100 = math.tanh %99 : vector<2x32xf32>
    %101 = arith.mulf %96, %100 : vector<2x32xf32>
    %c2_26 = arith.constant 2 : index
    %c0_27 = arith.constant 0 : index
    %102 = vector.load %arg7[%c2_26, %c0_27] : memref<16x32xf32, #tpu.memory_space<vmem>>, vector<2x32xf32>
    tpu.vector_store %arg7[%c2_26, %c0_27], %101 {strides = array<i32>} : memref<16x32xf32, #tpu.memory_space<vmem>>, vector<2x32xf32>,
    %103 = vector.extract_strided_slice %17 {offsets = [6, 0], sizes = [2, 256], strides = [1, 1]} : vector<16x256xf32> to vector<2x256xf32>
    %cst_28 = arith.constant dense<0.000000e+00> : vector<2x256xf32>
    %104 = tpu.matmul %92, %18, %cst_28 {dimension_numbers = #tpu.dot_dimension_numbers<[1], [0], [0], [1], [0, 0, 1, 1], [], []>} : vector<2x32xf32>, vector<32x256xf32>, vector<2x256xf32> -> vector<2x256xf32>
    %105 = arith.addf %103, %104 : vector<2x256xf32>
    %cst_29 = arith.constant dense<0.000000e+00> : vector<2x256xf32>
    %106 = tpu.matmul %101, %19, %cst_29 {dimension_numbers = #tpu.dot_dimension_numbers<[1], [0], [0], [1], [0, 0, 1, 1], [], []>} : vector<2x32xf32>, vector<32x256xf32>, vector<2x256xf32> -> vector<2x256xf32>
    %107 = arith.addf %105, %106 : vector<2x256xf32>
    %108 = math.tanh %107 : vector<2x256xf32>
    %109 = arith.mulf %108, %21 : vector<2x256xf32>
    %110 = arith.addf %109, %23 : vector<2x256xf32>
    %111 = vector.extract_strided_slice %110 {offsets = [0, 0], sizes = [2, 32], strides = [1, 1]} : vector<2x256xf32> to vector<2x32xf32>
    %112 = vector.extract_strided_slice %110 {offsets = [0, 32], sizes = [2, 32], strides = [1, 1]} : vector<2x256xf32> to vector<2x32xf32>
    %113 = vector.extract_strided_slice %110 {offsets = [0, 64], sizes = [2, 32], strides = [1, 1]} : vector<2x256xf32> to vector<2x32xf32>
    %114 = vector.extract_strided_slice %110 {offsets = [0, 96], sizes = [2, 32], strides = [1, 1]} : vector<2x256xf32> to vector<2x32xf32>
    %115 = arith.mulf %112, %90 : vector<2x32xf32>
    %116 = arith.mulf %111, %113 : vector<2x32xf32>
    %117 = arith.addf %115, %116 : vector<2x32xf32>
    %118 = math.tanh %117 : vector<2x32xf32>
    %119 = arith.mulf %114, %118 : vector<2x32xf32>
    %120 = vector.extract_strided_slice %110 {offsets = [0, 128], sizes = [2, 32], strides = [1, 1]} : vector<2x256xf32> to vector<2x32xf32>
    %121 = vector.extract_strided_slice %110 {offsets = [0, 160], sizes = [2, 32], strides = [1, 1]} : vector<2x256xf32> to vector<2x32xf32>
    %122 = vector.extract_strided_slice %110 {offsets = [0, 192], sizes = [2, 32], strides = [1, 1]} : vector<2x256xf32> to vector<2x32xf32>
    %123 = vector.extract_strided_slice %110 {offsets = [0, 224], sizes = [2, 32], strides = [1, 1]} : vector<2x256xf32> to vector<2x32xf32>
    %124 = arith.mulf %121, %99 : vector<2x32xf32>
    %125 = arith.mulf %120, %122 : vector<2x32xf32>
    %126 = arith.addf %124, %125 : vector<2x32xf32>
    %127 = math.tanh %126 : vector<2x32xf32>
    %128 = arith.mulf %123, %127 : vector<2x32xf32>
    %c4 = arith.constant 4 : index
    %c0_30 = arith.constant 0 : index
    %129 = vector.load %arg7[%c4, %c0_30] : memref<16x32xf32, #tpu.memory_space<vmem>>, vector<2x32xf32>
    tpu.vector_store %arg7[%c4, %c0_30], %128 {strides = array<i32>} : memref<16x32xf32, #tpu.memory_space<vmem>>, vector<2x32xf32>,
    %130 = vector.extract_strided_slice %17 {offsets = [8, 0], sizes = [2, 256], strides = [1, 1]} : vector<16x256xf32> to vector<2x256xf32>
    %cst_31 = arith.constant dense<0.000000e+00> : vector<2x256xf32>
    %131 = tpu.matmul %119, %18, %cst_31 {dimension_numbers = #tpu.dot_dimension_numbers<[1], [0], [0], [1], [0, 0, 1, 1], [], []>} : vector<2x32xf32>, vector<32x256xf32>, vector<2x256xf32> -> vector<2x256xf32>
    %132 = arith.addf %130, %131 : vector<2x256xf32>
    %cst_32 = arith.constant dense<0.000000e+00> : vector<2x256xf32>
    %133 = tpu.matmul %128, %19, %cst_32 {dimension_numbers = #tpu.dot_dimension_numbers<[1], [0], [0], [1], [0, 0, 1, 1], [], []>} : vector<2x32xf32>, vector<32x256xf32>, vector<2x256xf32> -> vector<2x256xf32>
    %134 = arith.addf %132, %133 : vector<2x256xf32>
    %135 = math.tanh %134 : vector<2x256xf32>
    %136 = arith.mulf %135, %21 : vector<2x256xf32>
    %137 = arith.addf %136, %23 : vector<2x256xf32>
    %138 = vector.extract_strided_slice %137 {offsets = [0, 0], sizes = [2, 32], strides = [1, 1]} : vector<2x256xf32> to vector<2x32xf32>
    %139 = vector.extract_strided_slice %137 {offsets = [0, 32], sizes = [2, 32], strides = [1, 1]} : vector<2x256xf32> to vector<2x32xf32>
    %140 = vector.extract_strided_slice %137 {offsets = [0, 64], sizes = [2, 32], strides = [1, 1]} : vector<2x256xf32> to vector<2x32xf32>
    %141 = vector.extract_strided_slice %137 {offsets = [0, 96], sizes = [2, 32], strides = [1, 1]} : vector<2x256xf32> to vector<2x32xf32>
    %142 = arith.mulf %139, %117 : vector<2x32xf32>
    %143 = arith.mulf %138, %140 : vector<2x32xf32>
    %144 = arith.addf %142, %143 : vector<2x32xf32>
    %145 = math.tanh %144 : vector<2x32xf32>
    %146 = arith.mulf %141, %145 : vector<2x32xf32>
    %147 = vector.extract_strided_slice %137 {offsets = [0, 128], sizes = [2, 32], strides = [1, 1]} : vector<2x256xf32> to vector<2x32xf32>
    %148 = vector.extract_strided_slice %137 {offsets = [0, 160], sizes = [2, 32], strides = [1, 1]} : vector<2x256xf32> to vector<2x32xf32>
    %149 = vector.extract_strided_slice %137 {offsets = [0, 192], sizes = [2, 32], strides = [1, 1]} : vector<2x256xf32> to vector<2x32xf32>
    %150 = vector.extract_strided_slice %137 {offsets = [0, 224], sizes = [2, 32], strides = [1, 1]} : vector<2x256xf32> to vector<2x32xf32>
    %151 = arith.mulf %148, %126 : vector<2x32xf32>
    %152 = arith.mulf %147, %149 : vector<2x32xf32>
    %153 = arith.addf %151, %152 : vector<2x32xf32>
    %154 = math.tanh %153 : vector<2x32xf32>
    %155 = arith.mulf %150, %154 : vector<2x32xf32>
    %c6 = arith.constant 6 : index
    %c0_33 = arith.constant 0 : index
    %156 = vector.load %arg7[%c6, %c0_33] : memref<16x32xf32, #tpu.memory_space<vmem>>, vector<2x32xf32>
    tpu.vector_store %arg7[%c6, %c0_33], %155 {strides = array<i32>} : memref<16x32xf32, #tpu.memory_space<vmem>>, vector<2x32xf32>,
    %157 = vector.extract_strided_slice %17 {offsets = [10, 0], sizes = [2, 256], strides = [1, 1]} : vector<16x256xf32> to vector<2x256xf32>
    %cst_34 = arith.constant dense<0.000000e+00> : vector<2x256xf32>
    %158 = tpu.matmul %146, %18, %cst_34 {dimension_numbers = #tpu.dot_dimension_numbers<[1], [0], [0], [1], [0, 0, 1, 1], [], []>} : vector<2x32xf32>, vector<32x256xf32>, vector<2x256xf32> -> vector<2x256xf32>
    %159 = arith.addf %157, %158 : vector<2x256xf32>
    %cst_35 = arith.constant dense<0.000000e+00> : vector<2x256xf32>
    %160 = tpu.matmul %155, %19, %cst_35 {dimension_numbers = #tpu.dot_dimension_numbers<[1], [0], [0], [1], [0, 0, 1, 1], [], []>} : vector<2x32xf32>, vector<32x256xf32>, vector<2x256xf32> -> vector<2x256xf32>
    %161 = arith.addf %159, %160 : vector<2x256xf32>
    %162 = math.tanh %161 : vector<2x256xf32>
    %163 = arith.mulf %162, %21 : vector<2x256xf32>
    %164 = arith.addf %163, %23 : vector<2x256xf32>
    %165 = vector.extract_strided_slice %164 {offsets = [0, 0], sizes = [2, 32], strides = [1, 1]} : vector<2x256xf32> to vector<2x32xf32>
    %166 = vector.extract_strided_slice %164 {offsets = [0, 32], sizes = [2, 32], strides = [1, 1]} : vector<2x256xf32> to vector<2x32xf32>
    %167 = vector.extract_strided_slice %164 {offsets = [0, 64], sizes = [2, 32], strides = [1, 1]} : vector<2x256xf32> to vector<2x32xf32>
    %168 = vector.extract_strided_slice %164 {offsets = [0, 96], sizes = [2, 32], strides = [1, 1]} : vector<2x256xf32> to vector<2x32xf32>
    %169 = arith.mulf %166, %144 : vector<2x32xf32>
    %170 = arith.mulf %165, %167 : vector<2x32xf32>
    %171 = arith.addf %169, %170 : vector<2x32xf32>
    %172 = math.tanh %171 : vector<2x32xf32>
    %173 = arith.mulf %168, %172 : vector<2x32xf32>
    %174 = vector.extract_strided_slice %164 {offsets = [0, 128], sizes = [2, 32], strides = [1, 1]} : vector<2x256xf32> to vector<2x32xf32>
    %175 = vector.extract_strided_slice %164 {offsets = [0, 160], sizes = [2, 32], strides = [1, 1]} : vector<2x256xf32> to vector<2x32xf32>
    %176 = vector.extract_strided_slice %164 {offsets = [0, 192], sizes = [2, 32], strides = [1, 1]} : vector<2x256xf32> to vector<2x32xf32>
    %177 = vector.extract_strided_slice %164 {offsets = [0, 224], sizes = [2, 32], strides = [1, 1]} : vector<2x256xf32> to vector<2x32xf32>
    %178 = arith.mulf %175, %153 : vector<2x32xf32>
    %179 = arith.mulf %174, %176 : vector<2x32xf32>
    %180 = arith.addf %178, %179 : vector<2x32xf32>
    %181 = math.tanh %180 : vector<2x32xf32>
    %182 = arith.mulf %177, %181 : vector<2x32xf32>
    %c8 = arith.constant 8 : index
    %c0_36 = arith.constant 0 : index
    %183 = vector.load %arg7[%c8, %c0_36] : memref<16x32xf32, #tpu.memory_space<vmem>>, vector<2x32xf32>
    tpu.vector_store %arg7[%c8, %c0_36], %182 {strides = array<i32>} : memref<16x32xf32, #tpu.memory_space<vmem>>, vector<2x32xf32>,
    %184 = vector.extract_strided_slice %17 {offsets = [12, 0], sizes = [2, 256], strides = [1, 1]} : vector<16x256xf32> to vector<2x256xf32>
    %cst_37 = arith.constant dense<0.000000e+00> : vector<2x256xf32>
    %185 = tpu.matmul %173, %18, %cst_37 {dimension_numbers = #tpu.dot_dimension_numbers<[1], [0], [0], [1], [0, 0, 1, 1], [], []>} : vector<2x32xf32>, vector<32x256xf32>, vector<2x256xf32> -> vector<2x256xf32>
    %186 = arith.addf %184, %185 : vector<2x256xf32>
    %cst_38 = arith.constant dense<0.000000e+00> : vector<2x256xf32>
    %187 = tpu.matmul %182, %19, %cst_38 {dimension_numbers = #tpu.dot_dimension_numbers<[1], [0], [0], [1], [0, 0, 1, 1], [], []>} : vector<2x32xf32>, vector<32x256xf32>, vector<2x256xf32> -> vector<2x256xf32>
    %188 = arith.addf %186, %187 : vector<2x256xf32>
    %189 = math.tanh %188 : vector<2x256xf32>
    %190 = arith.mulf %189, %21 : vector<2x256xf32>
    %191 = arith.addf %190, %23 : vector<2x256xf32>
    %192 = vector.extract_strided_slice %191 {offsets = [0, 0], sizes = [2, 32], strides = [1, 1]} : vector<2x256xf32> to vector<2x32xf32>
    %193 = vector.extract_strided_slice %191 {offsets = [0, 32], sizes = [2, 32], strides = [1, 1]} : vector<2x256xf32> to vector<2x32xf32>
    %194 = vector.extract_strided_slice %191 {offsets = [0, 64], sizes = [2, 32], strides = [1, 1]} : vector<2x256xf32> to vector<2x32xf32>
    %195 = vector.extract_strided_slice %191 {offsets = [0, 96], sizes = [2, 32], strides = [1, 1]} : vector<2x256xf32> to vector<2x32xf32>
    %196 = arith.mulf %193, %171 : vector<2x32xf32>
    %197 = arith.mulf %192, %194 : vector<2x32xf32>
    %198 = arith.addf %196, %197 : vector<2x32xf32>
    %199 = math.tanh %198 : vector<2x32xf32>
    %200 = arith.mulf %195, %199 : vector<2x32xf32>
    %201 = vector.extract_strided_slice %191 {offsets = [0, 128], sizes = [2, 32], strides = [1, 1]} : vector<2x256xf32> to vector<2x32xf32>
    %202 = vector.extract_strided_slice %191 {offsets = [0, 160], sizes = [2, 32], strides = [1, 1]} : vector<2x256xf32> to vector<2x32xf32>
    %203 = vector.extract_strided_slice %191 {offsets = [0, 192], sizes = [2, 32], strides = [1, 1]} : vector<2x256xf32> to vector<2x32xf32>
    %204 = vector.extract_strided_slice %191 {offsets = [0, 224], sizes = [2, 32], strides = [1, 1]} : vector<2x256xf32> to vector<2x32xf32>
    %205 = arith.mulf %202, %180 : vector<2x32xf32>
    %206 = arith.mulf %201, %203 : vector<2x32xf32>
    %207 = arith.addf %205, %206 : vector<2x32xf32>
    %208 = math.tanh %207 : vector<2x32xf32>
    %209 = arith.mulf %204, %208 : vector<2x32xf32>
    %c10 = arith.constant 10 : index
    %c0_39 = arith.constant 0 : index
    %210 = vector.load %arg7[%c10, %c0_39] : memref<16x32xf32, #tpu.memory_space<vmem>>, vector<2x32xf32>
    tpu.vector_store %arg7[%c10, %c0_39], %209 {strides = array<i32>} : memref<16x32xf32, #tpu.memory_space<vmem>>, vector<2x32xf32>,
    %211 = vector.extract_strided_slice %17 {offsets = [14, 0], sizes = [2, 256], strides = [1, 1]} : vector<16x256xf32> to vector<2x256xf32>
    %cst_40 = arith.constant dense<0.000000e+00> : vector<2x256xf32>
    %212 = tpu.matmul %200, %18, %cst_40 {dimension_numbers = #tpu.dot_dimension_numbers<[1], [0], [0], [1], [0, 0, 1, 1], [], []>} : vector<2x32xf32>, vector<32x256xf32>, vector<2x256xf32> -> vector<2x256xf32>
    %213 = arith.addf %211, %212 : vector<2x256xf32>
    %cst_41 = arith.constant dense<0.000000e+00> : vector<2x256xf32>
    %214 = tpu.matmul %209, %19, %cst_41 {dimension_numbers = #tpu.dot_dimension_numbers<[1], [0], [0], [1], [0, 0, 1, 1], [], []>} : vector<2x32xf32>, vector<32x256xf32>, vector<2x256xf32> -> vector<2x256xf32>
    %215 = arith.addf %213, %214 : vector<2x256xf32>
    %216 = math.tanh %215 : vector<2x256xf32>
    %217 = arith.mulf %216, %21 : vector<2x256xf32>
    %218 = arith.addf %217, %23 : vector<2x256xf32>
    %219 = vector.extract_strided_slice %218 {offsets = [0, 0], sizes = [2, 32], strides = [1, 1]} : vector<2x256xf32> to vector<2x32xf32>
    %220 = vector.extract_strided_slice %218 {offsets = [0, 32], sizes = [2, 32], strides = [1, 1]} : vector<2x256xf32> to vector<2x32xf32>
    %221 = vector.extract_strided_slice %218 {offsets = [0, 64], sizes = [2, 32], strides = [1, 1]} : vector<2x256xf32> to vector<2x32xf32>
    %222 = vector.extract_strided_slice %218 {offsets = [0, 96], sizes = [2, 32], strides = [1, 1]} : vector<2x256xf32> to vector<2x32xf32>
    %223 = arith.mulf %220, %198 : vector<2x32xf32>
    %224 = arith.mulf %219, %221 : vector<2x32xf32>
    %225 = arith.addf %223, %224 : vector<2x32xf32>
    %226 = math.tanh %225 : vector<2x32xf32>
    %227 = arith.mulf %222, %226 : vector<2x32xf32>
    %228 = vector.extract_strided_slice %218 {offsets = [0, 128], sizes = [2, 32], strides = [1, 1]} : vector<2x256xf32> to vector<2x32xf32>
    %229 = vector.extract_strided_slice %218 {offsets = [0, 160], sizes = [2, 32], strides = [1, 1]} : vector<2x256xf32> to vector<2x32xf32>
    %230 = vector.extract_strided_slice %218 {offsets = [0, 192], sizes = [2, 32], strides = [1, 1]} : vector<2x256xf32> to vector<2x32xf32>
    %231 = vector.extract_strided_slice %218 {offsets = [0, 224], sizes = [2, 32], strides = [1, 1]} : vector<2x256xf32> to vector<2x32xf32>
    %232 = arith.mulf %229, %207 : vector<2x32xf32>
    %233 = arith.mulf %228, %230 : vector<2x32xf32>
    %234 = arith.addf %232, %233 : vector<2x32xf32>
    %235 = math.tanh %234 : vector<2x32xf32>
    %236 = arith.mulf %231, %235 : vector<2x32xf32>
    %c12 = arith.constant 12 : index
    %c0_42 = arith.constant 0 : index
    %237 = vector.load %arg7[%c12, %c0_42] : memref<16x32xf32, #tpu.memory_space<vmem>>, vector<2x32xf32>
    tpu.vector_store %arg7[%c12, %c0_42], %236 {strides = array<i32>} : memref<16x32xf32, #tpu.memory_space<vmem>>, vector<2x32xf32>,
    %238 = vector.extract_strided_slice %17 {offsets = [14, 0], sizes = [2, 256], strides = [1, 1]} : vector<16x256xf32> to vector<2x256xf32>
    %cst_43 = arith.constant dense<0.000000e+00> : vector<2x256xf32>
    %239 = tpu.matmul %227, %18, %cst_43 {dimension_numbers = #tpu.dot_dimension_numbers<[1], [0], [0], [1], [0, 0, 1, 1], [], []>} : vector<2x32xf32>, vector<32x256xf32>, vector<2x256xf32> -> vector<2x256xf32>
    %240 = arith.addf %238, %239 : vector<2x256xf32>
    %cst_44 = arith.constant dense<0.000000e+00> : vector<2x256xf32>
    %241 = tpu.matmul %236, %19, %cst_44 {dimension_numbers = #tpu.dot_dimension_numbers<[1], [0], [0], [1], [0, 0, 1, 1], [], []>} : vector<2x32xf32>, vector<32x256xf32>, vector<2x256xf32> -> vector<2x256xf32>
    %242 = arith.addf %240, %241 : vector<2x256xf32>
    %243 = math.tanh %242 : vector<2x256xf32>
    %244 = arith.mulf %243, %21 : vector<2x256xf32>
    %245 = arith.addf %244, %23 : vector<2x256xf32>
    %246 = vector.extract_strided_slice %245 {offsets = [0, 128], sizes = [2, 32], strides = [1, 1]} : vector<2x256xf32> to vector<2x32xf32>
    %247 = vector.extract_strided_slice %245 {offsets = [0, 160], sizes = [2, 32], strides = [1, 1]} : vector<2x256xf32> to vector<2x32xf32>
    %248 = vector.extract_strided_slice %245 {offsets = [0, 192], sizes = [2, 32], strides = [1, 1]} : vector<2x256xf32> to vector<2x32xf32>
    %249 = vector.extract_strided_slice %245 {offsets = [0, 224], sizes = [2, 32], strides = [1, 1]} : vector<2x256xf32> to vector<2x32xf32>
    %250 = arith.mulf %247, %234 : vector<2x32xf32>
    %251 = arith.mulf %246, %248 : vector<2x32xf32>
    %252 = arith.addf %250, %251 : vector<2x32xf32>
    %253 = math.tanh %252 : vector<2x32xf32>
    %254 = arith.mulf %249, %253 : vector<2x32xf32>
    %c14 = arith.constant 14 : index
    %c0_45 = arith.constant 0 : index
    %255 = vector.load %arg7[%c14, %c0_45] : memref<16x32xf32, #tpu.memory_space<vmem>>, vector<2x32xf32>
    tpu.vector_store %arg7[%c14, %c0_45], %254 {strides = array<i32>} : memref<16x32xf32, #tpu.memory_space<vmem>>, vector<2x32xf32>,
    %c0_46 = arith.constant 0 : index
    %c0_47 = arith.constant 0 : index
    %256 = vector.load %arg4[%c0_46, %c0_47] : memref<33x128xf32, #tpu.memory_space<vmem>>, vector<32x128xf32>
    %c32_48 = arith.constant 32 : index
    %c0_49 = arith.constant 0 : index
    %257 = vector.load %arg4[%c32_48, %c0_49] : memref<33x128xf32, #tpu.memory_space<vmem>>, vector<1x128xf32>
    %c0_50 = arith.constant 0 : index
    %c0_51 = arith.constant 0 : index
    %258 = vector.load %arg7[%c0_50, %c0_51] : memref<16x32xf32, #tpu.memory_space<vmem>>, vector<16x32xf32>
    %cst_52 = arith.constant dense<0.000000e+00> : vector<16x128xf32>
    %259 = tpu.matmul %258, %256, %cst_52 {dimension_numbers = #tpu.dot_dimension_numbers<[1], [0], [0], [1], [0, 0, 1, 1], [], []>} : vector<16x32xf32>, vector<32x128xf32>, vector<16x128xf32> -> vector<16x128xf32>
    %260 = vector.broadcast %257 : vector<1x128xf32> to vector<16x128xf32>
    %261 = arith.addf %259, %260 : vector<16x128xf32>
    %c0_53 = arith.constant 0 : index
    %c0_54 = arith.constant 0 : index
    %262 = vector.load %arg5[%c0_53, %c0_54] : memref<16x128xf32, #tpu.memory_space<vmem>>, vector<16x128xf32>
    tpu.vector_store %arg5[%c0_53, %c0_54], %261 {strides = array<i32>} : memref<16x128xf32, #tpu.memory_space<vmem>>, vector<16x128xf32>,
    %c0_55 = arith.constant 0 : index
    %c0_56 = arith.constant 0 : index
    %c0_57 = arith.constant 0 : index
    %263 = vector.load %arg6[%c0_55, %c0_56, %c0_57] : memref<4x2x32xf32, #tpu.memory_space<vmem>>, vector<1x2x32xf32>
    %264 = vector.shape_cast %263 : vector<1x2x32xf32> to vector<2x32xf32>
    %265 = vector.shape_cast %227 : vector<2x32xf32> to vector<1x2x32xf32>
    tpu.vector_store %arg6[%c0_55, %c0_56, %c0_57], %265 {strides = array<i32>} : memref<4x2x32xf32, #tpu.memory_space<vmem>>, vector<1x2x32xf32>,
    %c2_58 = arith.constant 2 : index
    %c0_59 = arith.constant 0 : index
    %c0_60 = arith.constant 0 : index
    %266 = vector.load %arg6[%c2_58, %c0_59, %c0_60] : memref<4x2x32xf32, #tpu.memory_space<vmem>>, vector<1x2x32xf32>
    %267 = vector.shape_cast %266 : vector<1x2x32xf32> to vector<2x32xf32>
    %268 = vector.shape_cast %225 : vector<2x32xf32> to vector<1x2x32xf32>
    tpu.vector_store %arg6[%c2_58, %c0_59, %c0_60], %268 {strides = array<i32>} : memref<4x2x32xf32, #tpu.memory_space<vmem>>, vector<1x2x32xf32>,
    %c1_61 = arith.constant 1 : index
    %c0_62 = arith.constant 0 : index
    %c0_63 = arith.constant 0 : index
    %269 = vector.load %arg6[%c1_61, %c0_62, %c0_63] : memref<4x2x32xf32, #tpu.memory_space<vmem>>, vector<1x2x32xf32>
    %270 = vector.shape_cast %269 : vector<1x2x32xf32> to vector<2x32xf32>
    %271 = vector.shape_cast %254 : vector<2x32xf32> to vector<1x2x32xf32>
    tpu.vector_store %arg6[%c1_61, %c0_62, %c0_63], %271 {strides = array<i32>} : memref<4x2x32xf32, #tpu.memory_space<vmem>>, vector<1x2x32xf32>,
    %c3_64 = arith.constant 3 : index
    %c0_65 = arith.constant 0 : index
    %c0_66 = arith.constant 0 : index
    %272 = vector.load %arg6[%c3_64, %c0_65, %c0_66] : memref<4x2x32xf32, #tpu.memory_space<vmem>>, vector<1x2x32xf32>
    %273 = vector.shape_cast %272 : vector<1x2x32xf32> to vector<2x32xf32>
    %274 = vector.shape_cast %252 : vector<2x32xf32> to vector<1x2x32xf32>
    tpu.vector_store %arg6[%c3_64, %c0_65, %c0_66], %274 {strides = array<i32>} : memref<4x2x32xf32, #tpu.memory_space<vmem>>, vector<1x2x32xf32>,
    return
  }
}

</mosaic_0001>

<llo_original>
// kernel: _forward.1
$region0: #{_forward.1}
  #allocation0 [shape = 'u32[]', space=smem, size = 0x4, offset = 0x4, fixed_abs, tag = 'smem constant byte address 0x4 - core index']
  #allocation1 [shape = 'u32[144,128]{1,0:T(1,128)}', space=vmem, size = 0x12000, scoped, tag = 'internal scratch']
  #allocation2 [shape = 'f32[16,32]{1,0:T(8,128)}', space=vmem, size = 0x2000, scoped, tag = 'scratch operand']
  %s0 = inlined_call_operand.vmem [shape: s32[16,2], index: 0, kind: input, shape index: {}]
  %s1 = inlined_call_operand.vmem [shape: f32[4,2,32], index: 1, kind: input, shape index: {}]
  %s2 = inlined_call_operand.vmem [shape: f32[19,256], index: 2, kind: input, shape index: {}]
  %s3 = inlined_call_operand.hbm [shape: f32[64,256], index: 3, kind: input, shape index: {}]
  %s4 = inlined_call_operand.hbm [shape: f32[33,128], index: 4, kind: input, shape index: {}]
  %s5 = inlined_call_operand.vmem [shape: f32[16,128], index: 5, kind: output, shape index: {0}]
  %s6 = inlined_call_operand.vmem [shape: f32[4,2,32], index: 6, kind: output, shape index: {1}]
  %7 = xla_tuple %s5, %s6
  %s8 = sld [smem:[#allocation0]]
  $region46: #{_forward.1} parent=0
    _
  %s10 = ssub.s32 1, %s8
  %s11 = scalar_select 0, %s10, %s8
  $region1: #{_forward.1} parent=0
    #allocation3 [shape = 'u8[65536]{0}', space=vmem, size = 0x10000, scoped, tag = 'input window, operand 3, single buffered']
    #allocation4 [shape = 's32[1]{0}', space=sflag, size = 0x4, scoped, tag = 'scoped memory for _forward.1']
    #allocation5 [shape = 'u8[20480]{0}', space=vmem, size = 0x5000, scoped, tag = 'input window, operand 4, single buffered']
    #allocation6 [shape = 's32[1]{0}', space=sflag, size = 0x4, scoped, tag = 'scoped memory for _forward.1']
    %12 = vsyncpa [#allocation4], 0
    %13 = vsyncpa [#allocation6], 0
    // Predicated region
    $region2: #{_forward.1} parent=1 // pred_check
      _
    $region3: #{_forward.1} parent=1 // pred_check_branch
      %15 = sbr.rel (0) target = $region5
    $region4: #{_forward.1} parent=1 // pred_region
      _
    $region5: #{_forward.1} parent=1 // pred_fallthru
      _
    // Predicated region
    $region6: #{_forward.1} parent=1 // pred_check
      _
    $region7: #{_forward.1} parent=1 // pred_check_branch
      %17 = sbr.rel (0) target = $region9
    $region8: #{_forward.1} parent=1 // pred_region
      _
    $region9: #{_forward.1} parent=1 // pred_fallthru
      _
    // Predicated region
    $region10: #{_forward.1} parent=1 // pred_check
      _
    $region11: #{_forward.1} parent=1 // pred_check_branch
      %19 = sbr.rel (0) target = $region13
    $region12: #{_forward.1} parent=1 // pred_region
      _
    $region13: #{_forward.1} parent=1 // pred_fallthru
      _
    // Predicated region
    $region14: #{_forward.1} parent=1 // pred_check
      _
    $region15: #{_forward.1} parent=1 // pred_check_branch
      %21 = sbr.rel (0) target = $region17
    $region16: #{_forward.1} parent=1 // pred_region
      %s23 = ssub.s32 2048, 2048
      %24 = vsyncadd [#allocation4], %s23
      %s25 = sshll.u32 [#allocation3], 4
      %s26 = int_to_ptr.vmem [resolvable:$true] %s25
      %31 = dma.hbm_to_vmem [thread:$0]  %s3, 2048, %s26, [#allocation4], 256, 256, 16
    $region17: #{_forward.1} parent=1 // pred_fallthru
      _
    // Predicated region
    $region18: #{_forward.1} parent=1 // pred_check
      _
    $region19: #{_forward.1} parent=1 // pred_check_branch
      %33 = sbr.rel (0) target = $region21
    $region20: #{_forward.1} parent=1 // pred_region
      %s35 = ssub.s32 640, 640
      %36 = vsyncadd [#allocation6], %s35
      %s37 = sshll.u32 [#allocation5], 4
      %s38 = int_to_ptr.vmem [resolvable:$true] %s37
      %43 = dma.hbm_to_vmem [thread:$0]  %s4, 640, %s38, [#allocation6], 128, 128, 8
    $region21: #{_forward.1} parent=1 // pred_fallthru
      _
    // Predicated region
    $region22: #{_forward.1} parent=1 // pred_check
      _
    $region23: #{_forward.1} parent=1 // pred_check_branch
      %45 = sbr.rel (0) target = $region25
    $region24: #{_forward.1} parent=1 // pred_region
      %46 = dma.done [#allocation4], 2048
    $region25: #{_forward.1} parent=1 // pred_fallthru
      _
    // Predicated region
    $region26: #{_forward.1} parent=1 // pred_check
      _
    $region27: #{_forward.1} parent=1 // pred_check_branch
      %48 = sbr.rel (0) target = $region29
    $region28: #{_forward.1} parent=1 // pred_region
      %49 = dma.done [#allocation6], 640
    $region29: #{_forward.1} parent=1 // pred_fallthru
      _
    %v50 = vld [vmem:[%s0] sm:$0xff]
    %v51 = vld [vmem:[%s0 + $0x8] sm:$0xff]
    %v52 = vlaneseq
    %v53 = vand.u32 %v52, 127
    %54 = vset.pattern.permute.xlu0 0
    %55 = vperm.xlu0 %54, %v50
    %v56 = vpop.permute.xlu0 %55
    %57 = vset.pattern.permute.xlu0 0
    %58 = vperm.xlu0 %57, %v51
    %v59 = vpop.permute.xlu0 %58
    %vm60 = vcmp.eq.s32.totalorder %v53, %v56
    %vm61 = vcmp.eq.s32.totalorder %v53, %v59
    %62 = vset.pattern.permute.xlu0 1
    %63 = vperm.xlu0 %62, %v50
    %v64 = vpop.permute.xlu0 %63
    %65 = vset.pattern.permute.xlu0 1
    %66 = vperm.xlu0 %65, %v51
    %v67 = vpop.permute.xlu0 %66
    %vm68 = vcmp.eq.s32.totalorder %v53, %v64
    %vm69 = vcmp.eq.s32.totalorder %v53, %v67
    %vm70 = vmor %vm60, %vm68
    %vm71 = vmor %vm61, %vm69
    %v72 = vsel %vm70, 1, 0
    %v73 = vsel %vm71, 1, 0
    %v74 = vcvt.s32.f32 %v72
    %v75 = vcvt.s32.f32 %v73
    %v76 = vld [vmem:[%s2] sm:$0xff]
    %v77 = vld [vmem:[%s2 + $0x8] sm:$0xff]
    %v78 = vld [vmem:[%s2 + $0x10] sm:$0xff]
    %v79 = vld [vmem:[%s2 + $0x18] sm:$0xff]
    %s80 = scalar_lea.vmem %s2, 32
    %v81 = vld [vmem:[%s80] ss:$8 sm:$0x3]
    %s82 = scalar_lea.vmem %s2, 33
    %v83 = vld [vmem:[%s82] ss:$8 sm:$0x3]
    %s84 = scalar_lea.vmem %s2, 34
    %v85 = vld [vmem:[%s84] ss:$8 sm:$0x3]
    %v87 = vlaneseq
    %v88 = vshrl.u32 %v87, 7
    %v89 = vsub.s32 0, %v88
    %v90 = vrot.slane %v81, %v89
    %v91 = vlaneseq
    %v92 = vshrl.u32 %v91, 7
    %v93 = vsub.s32 1, %v92
    %v94 = vrot.slane %v81, %v93
    %vm97 = vcmask 130048
    %v99 = vsel %vm97, %v74, 0
    %v102 = vsel %vm97, %v75, 0
    %104 = vmatprep.subr.mxu0 0.0
    %105 = vmatpush1.msra.mxu0 0.0
    %106 = vmatprep.subr.mxu0 0.0
    %107 = vmatpush1.msra.mxu0 0.0
    %108 = vmatprep.subr.mxu0 0.0
    %109 = vmatpush1.msra.mxu0 0.0
    %110 = vmatprep.subr.mxu0 0.0
    %111 = vmatpush1.msra.mxu0 0.0
    %112 = vmatprep.subr.mxu0 0.0
    %113 = vmatpush1.msra.mxu0 0.0
    %114 = vmatprep.subr.mxu0 0.0
    %115 = vmatpush1.msra.mxu0 0.0
    %116 = vmatprep.subr.mxu0 0.0
    %117 = vmatpush1.msra.mxu0 0.0
    %118 = vmatprep.subr.mxu0 0.0
    %119 = vmatpush1.msra.mxu0 0.0
    %120 = vmatprep.subr.mxu0 0.0
    %121 = vmatpush1.msra.mxu0 0.0
    %122 = vmatprep.subr.mxu0 0.0
    %123 = vmatpush1.msra.mxu0 0.0
    %124 = vmatprep.subr.mxu0 0.0
    %125 = vmatpush1.msra.mxu0 0.0
    %126 = vmatprep.subr.mxu0 0.0
    %127 = vmatpush1.msra.mxu0 0.0
    %128 = vmatprep.subr.mxu0 0.0
    %129 = vmatpush1.msra.mxu0 0.0
    %130 = vmatprep.subr.mxu0 0.0
    %131 = vmatpush1.msra.mxu0 0.0
    %132 = vmatprep.subr.mxu0 %v79
    %133 = vmatpush1.msra.mxu0 %v78
    %134 = vmatprep.subr.mxu0 %v77
    %135 = vmatpush1.msra.mxu0 %v76
    %136 = vmatprep.subr.mxu0 0.0
    %137 = vmatpush2.msra.mxu0 0.0
    %138 = vmatprep.subr.mxu0 0.0
    %139 = vmatpush2.msra.mxu0 0.0
    %140 = vmatprep.subr.mxu0 0.0
    %141 = vmatpush2.msra.mxu0 0.0
    %142 = vmatprep.subr.mxu0 0.0
    %143 = vmatpush2.msra.mxu0 0.0
    %144 = vmatprep.subr.mxu0 0.0
    %145 = vmatpush2.msra.mxu0 0.0
    %146 = vmatprep.subr.mxu0 0.0
    %147 = vmatpush2.msra.mxu0 0.0
    %148 = vmatprep.subr.mxu0 0.0
    %149 = vmatpush2.msra.mxu0 0.0
    %150 = vmatprep.subr.mxu0 0.0
    %151 = vmatpush2.msra.mxu0 0.0
    %152 = vmatprep.subr.mxu0 0.0
    %153 = vmatpush2.msra.mxu0 0.0
    %154 = vmatprep.subr.mxu0 0.0
    %155 = vmatpush2.msra.mxu0 0.0
    %156 = vmatprep.subr.mxu0 0.0
    %157 = vmatpush2.msra.mxu0 0.0
    %158 = vmatprep.subr.mxu0 0.0
    %159 = vmatpush2.msra.mxu0 0.0
    %160 = vmatprep.subr.mxu0 0.0
    %161 = vmatpush2.msra.mxu0 0.0
    %162 = vmatprep.subr.mxu0 0.0
    %163 = vmatpush2.msra.mxu0 0.0
    %164 = vmatprep.subr.mxu0 0.0
    %165 = vmatpush2.msra.mxu0 0.0
    %166 = vmatprep.subr.mxu0 0.0
    %167 = vmatpush2.msra.mxu0 0.0
    %168 = vmatprep.mubr.f32.mxu0 0.0
    %169 = vmatmul.mubr.f32.gmra.mxu0 %v99
    %v170 = vpop.f32.mrf.mxu0
    %v171 = vadd.f32 %v90, %v170
    %v172 = vpop.f32.mrf.mxu0
    %v173 = vadd.f32 %v94, %v172
    %174 = vmatprep.mubr.f32.mxu0 0.0
    %175 = vmatmul.mubr.f32.gmra.mxu0 %v102
    %v176 = vpop.f32.mrf.mxu0
    %v177 = vadd.f32 %v90, %v176
    %v178 = vpop.f32.mrf.mxu0
    %v179 = vadd.f32 %v94, %v178
    %180 = vdwg.mxu0
    %v181 = vld [vmem:[#allocation3] sm:$0xff]
    %v182 = vld [vmem:[#allocation3 + $0x8] sm:$0xff]
    %v183 = vld [vmem:[#allocation3 + $0x10] sm:$0xff]
    %v184 = vld [vmem:[#allocation3 + $0x18] sm:$0xff]
    %v185 = vld [vmem:[#allocation3 + $0x20] sm:$0xff]
    %v186 = vld [vmem:[#allocation3 + $0x28] sm:$0xff]
    %v187 = vld [vmem:[#allocation3 + $0x30] sm:$0xff]
    %v188 = vld [vmem:[#allocation3 + $0x38] sm:$0xff]
    %v189 = vld [vmem:[#allocation3 + $0x40] sm:$0xff]
    %v190 = vld [vmem:[#allocation3 + $0x48] sm:$0xff]
    %v191 = vld [vmem:[#allocation3 + $0x50] sm:$0xff]
    %v192 = vld [vmem:[#allocation3 + $0x58] sm:$0xff]
    %v193 = vld [vmem:[#allocation3 + $0x60] sm:$0xff]
    %v194 = vld [vmem:[#allocation3 + $0x68] sm:$0xff]
    %v195 = vld [vmem:[#allocation3 + $0x70] sm:$0xff]
    %v196 = vld [vmem:[#allocation3 + $0x78] sm:$0xff]
    %v198 = vlaneseq
    %v199 = vshrl.u32 %v198, 7
    %v200 = vsub.s32 0, %v199
    %v201 = vrot.slane %v83, %v200
    %v202 = vlaneseq
    %v203 = vshrl.u32 %v202, 7
    %v204 = vsub.s32 1, %v203
    %v205 = vrot.slane %v83, %v204
    %v209 = vlaneseq
    %v210 = vshrl.u32 %v209, 7
    %v211 = vsub.s32 0, %v210
    %v212 = vrot.slane %v85, %v211
    %v213 = vlaneseq
    %v214 = vshrl.u32 %v213, 7
    %v215 = vsub.s32 1, %v214
    %v216 = vrot.slane %v85, %v215
    %v219 = vld [vmem:[%s1] sm:$0x3]
    %s220 = scalar_lea.vmem %s1, 2
    %v221 = vld [vmem:[%s220] sm:$0x3]
    %s222 = scalar_lea.vmem %s1, 4
    %v223 = vld [vmem:[%s222] sm:$0x3]
    %s224 = scalar_lea.vmem %s1, 6
    %v225 = vld [vmem:[%s224] sm:$0x3]
    %vm226 = vcmask 261120
    %v228 = vsel %vm226, %v219, 0
    %230 = vmatprep.subr.mxu0 0.0
    %231 = vmatpush1.msra.mxu0 0.0
    %232 = vmatprep.subr.mxu0 0.0
    %233 = vmatpush1.msra.mxu0 0.0
    %234 = vmatprep.subr.mxu0 0.0
    %235 = vmatpush1.msra.mxu0 0.0
    %236 = vmatprep.subr.mxu0 0.0
    %237 = vmatpush1.msra.mxu0 0.0
    %238 = vmatprep.subr.mxu0 0.0
    %239 = vmatpush1.msra.mxu0 0.0
    %240 = vmatprep.subr.mxu0 0.0
    %241 = vmatpush1.msra.mxu0 0.0
    %242 = vmatprep.subr.mxu0 0.0
    %243 = vmatpush1.msra.mxu0 0.0
    %244 = vmatprep.subr.mxu0 0.0
    %245 = vmatpush1.msra.mxu0 0.0
    %246 = vmatprep.subr.mxu0 0.0
    %247 = vmatpush1.msra.mxu0 0.0
    %248 = vmatprep.subr.mxu0 0.0
    %249 = vmatpush1.msra.mxu0 0.0
    %250 = vmatprep.subr.mxu0 0.0
    %251 = vmatpush1.msra.mxu0 0.0
    %252 = vmatprep.subr.mxu0 0.0
    %253 = vmatpush1.msra.mxu0 0.0
    %254 = vmatprep.subr.mxu0 %v188
    %255 = vmatpush1.msra.mxu0 %v187
    %256 = vmatprep.subr.mxu0 %v186
    %257 = vmatpush1.msra.mxu0 %v185
    %258 = vmatprep.subr.mxu0 %v184
    %259 = vmatpush1.msra.mxu0 %v183
    %260 = vmatprep.subr.mxu0 %v182
    %261 = vmatpush1.msra.mxu0 %v181
    %262 = vmatprep.subr.mxu0 0.0
    %263 = vmatpush2.msra.mxu0 0.0
    %264 = vmatprep.subr.mxu0 0.0
    %265 = vmatpush2.msra.mxu0 0.0
    %266 = vmatprep.subr.mxu0 0.0
    %267 = vmatpush2.msra.mxu0 0.0
    %268 = vmatprep.subr.mxu0 0.0
    %269 = vmatpush2.msra.mxu0 0.0
    %270 = vmatprep.subr.mxu0 0.0
    %271 = vmatpush2.msra.mxu0 0.0
    %272 = vmatprep.subr.mxu0 0.0
    %273 = vmatpush2.msra.mxu0 0.0
    %274 = vmatprep.subr.mxu0 0.0
    %275 = vmatpush2.msra.mxu0 0.0
    %276 = vmatprep.subr.mxu0 0.0
    %277 = vmatpush2.msra.mxu0 0.0
    %278 = vmatprep.subr.mxu0 0.0
    %279 = vmatpush2.msra.mxu0 0.0
    %280 = vmatprep.subr.mxu0 0.0
    %281 = vmatpush2.msra.mxu0 0.0
    %282 = vmatprep.subr.mxu0 0.0
    %283 = vmatpush2.msra.mxu0 0.0
    %284 = vmatprep.subr.mxu0 0.0
    %285 = vmatpush2.msra.mxu0 0.0
    %286 = vmatprep.subr.mxu0 0.0
    %287 = vmatpush2.msra.mxu0 0.0
    %288 = vmatprep.subr.mxu0 0.0
    %289 = vmatpush2.msra.mxu0 0.0
    %290 = vmatprep.subr.mxu0 0.0
    %291 = vmatpush2.msra.mxu0 0.0
    %292 = vmatprep.subr.mxu0 0.0
    %293 = vmatpush2.msra.mxu0 0.0
    %294 = vmatprep.mubr.f32.mxu0 0.0
    %295 = vmatmul.mubr.f32.gmra.mxu0 %v228
    %v296 = vpop.f32.mrf.mxu0
    %v297 = vadd.f32 0.0, %v296
    %v298 = vpop.f32.mrf.mxu0
    %299 = vdwg.mxu0
    %v300 = vadd.f32 %v171, %v297
    %v302 = vsel %vm226, %v221, 0
    %304 = vmatprep.subr.mxu0 0.0
    %305 = vmatpush1.msra.mxu0 0.0
    %306 = vmatprep.subr.mxu0 0.0
    %307 = vmatpush1.msra.mxu0 0.0
    %308 = vmatprep.subr.mxu0 0.0
    %309 = vmatpush1.msra.mxu0 0.0
    %310 = vmatprep.subr.mxu0 0.0
    %311 = vmatpush1.msra.mxu0 0.0
    %312 = vmatprep.subr.mxu0 0.0
    %313 = vmatpush1.msra.mxu0 0.0
    %314 = vmatprep.subr.mxu0 0.0
    %315 = vmatpush1.msra.mxu0 0.0
    %316 = vmatprep.subr.mxu0 0.0
    %317 = vmatpush1.msra.mxu0 0.0
    %318 = vmatprep.subr.mxu0 0.0
    %319 = vmatpush1.msra.mxu0 0.0
    %320 = vmatprep.subr.mxu0 0.0
    %321 = vmatpush1.msra.mxu0 0.0
    %322 = vmatprep.subr.mxu0 0.0
    %323 = vmatpush1.msra.mxu0 0.0
    %324 = vmatprep.subr.mxu0 0.0
    %325 = vmatpush1.msra.mxu0 0.0
    %326 = vmatprep.subr.mxu0 0.0
    %327 = vmatpush1.msra.mxu0 0.0
    %328 = vmatprep.subr.mxu0 %v196
    %329 = vmatpush1.msra.mxu0 %v195
    %330 = vmatprep.subr.mxu0 %v194
    %331 = vmatpush1.msra.mxu0 %v193
    %332 = vmatprep.subr.mxu0 %v192
    %333 = vmatpush1.msra.mxu0 %v191
    %334 = vmatprep.subr.mxu0 %v190
    %335 = vmatpush1.msra.mxu0 %v189
    %336 = vmatprep.subr.mxu0 0.0
    %337 = vmatpush2.msra.mxu0 0.0
    %338 = vmatprep.subr.mxu0 0.0
    %339 = vmatpush2.msra.mxu0 0.0
    %340 = vmatprep.subr.mxu0 0.0
    %341 = vmatpush2.msra.mxu0 0.0
    %342 = vmatprep.subr.mxu0 0.0
    %343 = vmatpush2.msra.mxu0 0.0
    %344 = vmatprep.subr.mxu0 0.0
    %345 = vmatpush2.msra.mxu0 0.0
    %346 = vmatprep.subr.mxu0 0.0
    %347 = vmatpush2.msra.mxu0 0.0
    %348 = vmatprep.subr.mxu0 0.0
    %349 = vmatpush2.msra.mxu0 0.0
    %350 = vmatprep.subr.mxu0 0.0
    %351 = vmatpush2.msra.mxu0 0.0
    %352 = vmatprep.subr.mxu0 0.0
    %353 = vmatpush2.msra.mxu0 0.0
    %354 = vmatprep.subr.mxu0 0.0
    %355 = vmatpush2.msra.mxu0 0.0
    %356 = vmatprep.subr.mxu0 0.0
    %357 = vmatpush2.msra.mxu0 0.0
    %358 = vmatprep.subr.mxu0 0.0
    %359 = vmatpush2.msra.mxu0 0.0
    %360 = vmatprep.subr.mxu0 0.0
    %361 = vmatpush2.msra.mxu0 0.0
    %362 = vmatprep.subr.mxu0 0.0
    %363 = vmatpush2.msra.mxu0 0.0
    %364 = vmatprep.subr.mxu0 0.0
    %365 = vmatpush2.msra.mxu0 0.0
    %366 = vmatprep.subr.mxu0 0.0
    %367 = vmatpush2.msra.mxu0 0.0
    %368 = vmatprep.mubr.f32.mxu0 0.0
    %369 = vmatmul.mubr.f32.gmra.mxu0 %v302
    %v370 = vpop.f32.mrf.mxu0
    %v371 = vadd.f32 0.0, %v370
    %v372 = vpop.f32.mrf.mxu0
    %v373 = vadd.f32 0.0, %v372
    %374 = vdwg.mxu0
    %v375 = vadd.f32 %v300, %v371
    %v376 = vtanh.pop %v375
    %v377 = vmul.f32 %v376, %v201
    %v378 = vadd.f32 %v377, %v212
    %380 = vrot.lane.b32.xlu0 %v223, 32
    %v381 = vpop.permute.xlu0 %380
    %v383 = vmul.f32 %v378, %v381
    %385 = vrot.lane.b32.xlu0 %v378, 64
    %v386 = vpop.permute.xlu0 %385
    %v388 = vmul.f32 %v378, %v386
    %390 = vrot.lane.b32.xlu0 %v388, 32
    %v391 = vpop.permute.xlu0 %390
    %v393 = vadd.f32 %v383, %v391
    %v394 = vtanh.pop %v393
    %396 = vrot.lane.b32.xlu0 %v394, 64
    %v397 = vpop.permute.xlu0 %396
    %v399 = vmul.f32 %v378, %v397
    %401 = vrot.lane.b32.xlu0 %v399, 32
    %v402 = vpop.permute.xlu0 %401
    %v403 = vsel %vm226, %v402, 0
    %405 = vmatprep.subr.mxu0 0.0
    %406 = vmatpush1.msra.mxu0 0.0
    %407 = vmatprep.subr.mxu0 0.0
    %408 = vmatpush1.msra.mxu0 0.0
    %409 = vmatprep.subr.mxu0 0.0
    %410 = vmatpush1.msra.mxu0 0.0
    %411 = vmatprep.subr.mxu0 0.0
    %412 = vmatpush1.msra.mxu0 0.0
    %413 = vmatprep.subr.mxu0 0.0
    %414 = vmatpush1.msra.mxu0 0.0
    %415 = vmatprep.subr.mxu0 0.0
    %416 = vmatpush1.msra.mxu0 0.0
    %417 = vmatprep.subr.mxu0 0.0
    %418 = vmatpush1.msra.mxu0 0.0
    %419 = vmatprep.subr.mxu0 0.0
    %420 = vmatpush1.msra.mxu0 0.0
    %421 = vmatprep.subr.mxu0 0.0
    %422 = vmatpush1.msra.mxu0 0.0
    %423 = vmatprep.subr.mxu0 0.0
    %424 = vmatpush1.msra.mxu0 0.0
    %425 = vmatprep.subr.mxu0 0.0
    %426 = vmatpush1.msra.mxu0 0.0
    %427 = vmatprep.subr.mxu0 0.0
    %428 = vmatpush1.msra.mxu0 0.0
    %429 = vmatprep.subr.mxu0 %v188
    %430 = vmatpush1.msra.mxu0 %v187
    %431 = vmatprep.subr.mxu0 %v186
    %432 = vmatpush1.msra.mxu0 %v185
    %433 = vmatprep.subr.mxu0 %v184
    %434 = vmatpush1.msra.mxu0 %v183
    %435 = vmatprep.subr.mxu0 %v182
    %436 = vmatpush1.msra.mxu0 %v181
    %437 = vmatprep.subr.mxu0 0.0
    %438 = vmatpush2.msra.mxu0 0.0
    %439 = vmatprep.subr.mxu0 0.0
    %440 = vmatpush2.msra.mxu0 0.0
    %441 = vmatprep.subr.mxu0 0.0
    %442 = vmatpush2.msra.mxu0 0.0
    %443 = vmatprep.subr.mxu0 0.0
    %444 = vmatpush2.msra.mxu0 0.0
    %445 = vmatprep.subr.mxu0 0.0
    %446 = vmatpush2.msra.mxu0 0.0
    %447 = vmatprep.subr.mxu0 0.0
    %448 = vmatpush2.msra.mxu0 0.0
    %449 = vmatprep.subr.mxu0 0.0
    %450 = vmatpush2.msra.mxu0 0.0
    %451 = vmatprep.subr.mxu0 0.0
    %452 = vmatpush2.msra.mxu0 0.0
    %453 = vmatprep.subr.mxu0 0.0
    %454 = vmatpush2.msra.mxu0 0.0
    %455 = vmatprep.subr.mxu0 0.0
    %456 = vmatpush2.msra.mxu0 0.0
    %457 = vmatprep.subr.mxu0 0.0
    %458 = vmatpush2.msra.mxu0 0.0
    %459 = vmatprep.subr.mxu0 0.0
    %460 = vmatpush2.msra.mxu0 0.0
    %461 = vmatprep.subr.mxu0 0.0
    %462 = vmatpush2.msra.mxu0 0.0
    %463 = vmatprep.subr.mxu0 0.0
    %464 = vmatpush2.msra.mxu0 0.0
    %465 = vmatprep.subr.mxu0 0.0
    %466 = vmatpush2.msra.mxu0 0.0
    %467 = vmatprep.subr.mxu0 0.0
    %468 = vmatpush2.msra.mxu0 0.0
    %469 = vmatprep.mubr.f32.mxu0 0.0
    %470 = vmatmul.mubr.f32.gmra.mxu0 %v403
    %v471 = vpop.f32.mrf.mxu0
    %v472 = vadd.f32 0.0, %v471
    %v473 = vpop.f32.mrf.mxu0
    %v474 = vadd.f32 0.0, %v473
    %475 = vdwg.mxu0
    %v478 = vrot.slane %v472, 6
    %v479 = vrot.slane %v474, 6
    %v482 = vadd.f32 %v171, %v478
    %v483 = vadd.f32 %v173, %v479
    %v486 = vrot.slane %v371, 6
    %v487 = vrot.slane %v373, 6
    %v490 = vadd.f32 %v482, %v486
    %v491 = vadd.f32 %v483, %v487
    %v492 = vtanh.pop %v490
    %v493 = vtanh.pop %v491
    %v494 = vmul.f32 %v492, %v201
    %v495 = vmul.f32 %v493, %v205
    %v496 = vadd.f32 %v494, %v212
    %v497 = vadd.f32 %v495, %v216
    %v499 = vrot.slane %v393, 6
    %v501 = vmul.f32 %v496, %v499
    %503 = vrot.lane.b32.xlu0 %v496, 64
    %v504 = vpop.permute.xlu0 %503
    %v506 = vmul.f32 %v496, %v504
    %508 = vrot.lane.b32.xlu0 %v506, 32
    %v509 = vpop.permute.xlu0 %508
    %v511 = vadd.f32 %v501, %v509
    %v512 = vtanh.pop %v511
    %514 = vrot.lane.b32.xlu0 %v512, 64
    %v515 = vpop.permute.xlu0 %514
    %v517 = vmul.f32 %v496, %v515
    %v519 = vrot.slane %v225, 6
    %520 = vrot.lane.b32.xlu0 %v519, 32
    %v521 = vpop.permute.xlu0 %520
    %v523 = vmul.f32 %v497, %v521
    %525 = vrot.lane.b32.xlu0 %v497, 64
    %v526 = vpop.permute.xlu0 %525
    %v528 = vmul.f32 %v497, %v526
    %530 = vrot.lane.b32.xlu0 %v528, 32
    %v531 = vpop.permute.xlu0 %530
    %v533 = vadd.f32 %v523, %v531
    %v534 = vtanh.pop %v533
    %536 = vrot.lane.b32.xlu0 %v534, 64
    %v537 = vpop.permute.xlu0 %536
    %v539 = vmul.f32 %v497, %v537
    %541 = vrot.lane.b32.xlu0 %v539, 32
    %v542 = vpop.permute.xlu0 %541
    %vm544 = vcmask 257026
    %545 = vst.msk [vmem:[#allocation2 - $0x2] sm:$0xc] %vm544, %v542
    %v547 = vrot.slane %v517, 2
    %548 = vrot.lane.b32.xlu0 %v547, 32
    %v549 = vpop.permute.xlu0 %548
    %v550 = vsel %vm226, %v549, 0
    %552 = vmatprep.subr.mxu0 0.0
    %553 = vmatpush1.msra.mxu0 0.0
    %554 = vmatprep.subr.mxu0 0.0
    %555 = vmatpush1.msra.mxu0 0.0
    %556 = vmatprep.subr.mxu0 0.0
    %557 = vmatpush1.msra.mxu0 0.0
    %558 = vmatprep.subr.mxu0 0.0
    %559 = vmatpush1.msra.mxu0 0.0
    %560 = vmatprep.subr.mxu0 0.0
    %561 = vmatpush1.msra.mxu0 0.0
    %562 = vmatprep.subr.mxu0 0.0
    %563 = vmatpush1.msra.mxu0 0.0
    %564 = vmatprep.subr.mxu0 0.0
    %565 = vmatpush1.msra.mxu0 0.0
    %566 = vmatprep.subr.mxu0 0.0
    %567 = vmatpush1.msra.mxu0 0.0
    %568 = vmatprep.subr.mxu0 0.0
    %569 = vmatpush1.msra.mxu0 0.0
    %570 = vmatprep.subr.mxu0 0.0
    %571 = vmatpush1.msra.mxu0 0.0
    %572 = vmatprep.subr.mxu0 0.0
    %573 = vmatpush1.msra.mxu0 0.0
    %574 = vmatprep.subr.mxu0 0.0
    %575 = vmatpush1.msra.mxu0 0.0
    %576 = vmatprep.subr.mxu0 %v188
    %577 = vmatpush1.msra.mxu0 %v187
    %578 = vmatprep.subr.mxu0 %v186
    %579 = vmatpush1.msra.mxu0 %v185
    %580 = vmatprep.subr.mxu0 %v184
    %581 = vmatpush1.msra.mxu0 %v183
    %582 = vmatprep.subr.mxu0 %v182
    %583 = vmatpush1.msra.mxu0 %v181
    %584 = vmatprep.subr.mxu0 0.0
    %585 = vmatpush2.msra.mxu0 0.0
    %586 = vmatprep.subr.mxu0 0.0
    %587 = vmatpush2.msra.mxu0 0.0
    %588 = vmatprep.subr.mxu0 0.0
    %589 = vmatpush2.msra.mxu0 0.0
    %590 = vmatprep.subr.mxu0 0.0
    %591 = vmatpush2.msra.mxu0 0.0
    %592 = vmatprep.subr.mxu0 0.0
    %593 = vmatpush2.msra.mxu0 0.0
    %594 = vmatprep.subr.mxu0 0.0
    %595 = vmatpush2.msra.mxu0 0.0
    %596 = vmatprep.subr.mxu0 0.0
    %597 = vmatpush2.msra.mxu0 0.0
    %598 = vmatprep.subr.mxu0 0.0
    %599 = vmatpush2.msra.mxu0 0.0
    %600 = vmatprep.subr.mxu0 0.0
    %601 = vmatpush2.msra.mxu0 0.0
    %602 = vmatprep.subr.mxu0 0.0
    %603 = vmatpush2.msra.mxu0 0.0
    %604 = vmatprep.subr.mxu0 0.0
    %605 = vmatpush2.msra.mxu0 0.0
    %606 = vmatprep.subr.mxu0 0.0
    %607 = vmatpush2.msra.mxu0 0.0
    %608 = vmatprep.subr.mxu0 0.0
    %609 = vmatpush2.msra.mxu0 0.0
    %610 = vmatprep.subr.mxu0 0.0
    %611 = vmatpush2.msra.mxu0 0.0
    %612 = vmatprep.subr.mxu0 0.0
    %613 = vmatpush2.msra.mxu0 0.0
    %614 = vmatprep.subr.mxu0 0.0
    %615 = vmatpush2.msra.mxu0 0.0
    %616 = vmatprep.mubr.f32.mxu0 0.0
    %617 = vmatmul.mubr.f32.gmra.mxu0 %v550
    %v618 = vpop.f32.mrf.mxu0
    %v619 = vadd.f32 0.0, %v618
    %v620 = vpop.f32.mrf.mxu0
    %v621 = vadd.f32 0.0, %v620
    %622 = vdwg.mxu0
    %v625 = vrot.slane %v619, 4
    %v626 = vrot.slane %v621, 4
    %v629 = vadd.f32 %v171, %v625
    %v630 = vadd.f32 %v173, %v626
    %v631 = vrot.slane %v539, 2
    %632 = vrot.lane.b32.xlu0 %v631, 32
    %v633 = vpop.permute.xlu0 %632
    %v634 = vsel %vm226, %v633, 0
    %636 = vmatprep.subr.mxu0 0.0
    %637 = vmatpush1.msra.mxu0 0.0
    %638 = vmatprep.subr.mxu0 0.0
    %639 = vmatpush1.msra.mxu0 0.0
    %640 = vmatprep.subr.mxu0 0.0
    %641 = vmatpush1.msra.mxu0 0.0
    %642 = vmatprep.subr.mxu0 0.0
    %643 = vmatpush1.msra.mxu0 0.0
    %644 = vmatprep.subr.mxu0 0.0
    %645 = vmatpush1.msra.mxu0 0.0
    %646 = vmatprep.subr.mxu0 0.0
    %647 = vmatpush1.msra.mxu0 0.0
    %648 = vmatprep.subr.mxu0 0.0
    %649 = vmatpush1.msra.mxu0 0.0
    %650 = vmatprep.subr.mxu0 0.0
    %651 = vmatpush1.msra.mxu0 0.0
    %652 = vmatprep.subr.mxu0 0.0
    %653 = vmatpush1.msra.mxu0 0.0
    %654 = vmatprep.subr.mxu0 0.0
    %655 = vmatpush1.msra.mxu0 0.0
    %656 = vmatprep.subr.mxu0 0.0
    %657 = vmatpush1.msra.mxu0 0.0
    %658 = vmatprep.subr.mxu0 0.0
    %659 = vmatpush1.msra.mxu0 0.0
    %660 = vmatprep.subr.mxu0 %v196
    %661 = vmatpush1.msra.mxu0 %v195
    %662 = vmatprep.subr.mxu0 %v194
    %663 = vmatpush1.msra.mxu0 %v193
    %664 = vmatprep.subr.mxu0 %v192
    %665 = vmatpush1.msra.mxu0 %v191
    %666 = vmatprep.subr.mxu0 %v190
    %667 = vmatpush1.msra.mxu0 %v189
    %668 = vmatprep.subr.mxu0 0.0
    %669 = vmatpush2.msra.mxu0 0.0
    %670 = vmatprep.subr.mxu0 0.0
    %671 = vmatpush2.msra.mxu0 0.0
    %672 = vmatprep.subr.mxu0 0.0
    %673 = vmatpush2.msra.mxu0 0.0
    %674 = vmatprep.subr.mxu0 0.0
    %675 = vmatpush2.msra.mxu0 0.0
    %676 = vmatprep.subr.mxu0 0.0
    %677 = vmatpush2.msra.mxu0 0.0
    %678 = vmatprep.subr.mxu0 0.0
    %679 = vmatpush2.msra.mxu0 0.0
    %680 = vmatprep.subr.mxu0 0.0
    %681 = vmatpush2.msra.mxu0 0.0
    %682 = vmatprep.subr.mxu0 0.0
    %683 = vmatpush2.msra.mxu0 0.0
    %684 = vmatprep.subr.mxu0 0.0
    %685 = vmatpush2.msra.mxu0 0.0
    %686 = vmatprep.subr.mxu0 0.0
    %687 = vmatpush2.msra.mxu0 0.0
    %688 = vmatprep.subr.mxu0 0.0
    %689 = vmatpush2.msra.mxu0 0.0
    %690 = vmatprep.subr.mxu0 0.0
    %691 = vmatpush2.msra.mxu0 0.0
    %692 = vmatprep.subr.mxu0 0.0
    %693 = vmatpush2.msra.mxu0 0.0
    %694 = vmatprep.subr.mxu0 0.0
    %695 = vmatpush2.msra.mxu0 0.0
    %696 = vmatprep.subr.mxu0 0.0
    %697 = vmatpush2.msra.mxu0 0.0
    %698 = vmatprep.subr.mxu0 0.0
    %699 = vmatpush2.msra.mxu0 0.0
    %700 = vmatprep.mubr.f32.mxu0 0.0
    %701 = vmatmul.mubr.f32.gmra.mxu0 %v634
    %v702 = vpop.f32.mrf.mxu0
    %v703 = vadd.f32 0.0, %v702
    %v704 = vpop.f32.mrf.mxu0
    %v705 = vadd.f32 0.0, %v704
    %706 = vdwg.mxu0
    %v709 = vrot.slane %v703, 4
    %v710 = vrot.slane %v705, 4
    %v713 = vadd.f32 %v629, %v709
    %v714 = vadd.f32 %v630, %v710
    %v715 = vtanh.pop %v713
    %v716 = vtanh.pop %v714
    %v717 = vmul.f32 %v715, %v201
    %v718 = vmul.f32 %v716, %v205
    %v719 = vadd.f32 %v717, %v212
    %v720 = vadd.f32 %v718, %v216
    %v722 = vrot.slane %v511, 6
    %v724 = vmul.f32 %v719, %v722
    %726 = vrot.lane.b32.xlu0 %v719, 64
    %v727 = vpop.permute.xlu0 %726
    %v729 = vmul.f32 %v719, %v727
    %731 = vrot.lane.b32.xlu0 %v729, 32
    %v732 = vpop.permute.xlu0 %731
    %v734 = vadd.f32 %v724, %v732
    %v735 = vtanh.pop %v734
    %737 = vrot.lane.b32.xlu0 %v735, 64
    %v738 = vpop.permute.xlu0 %737
    %v740 = vmul.f32 %v719, %v738
    %v742 = vrot.slane %v533, 6
    %v744 = vmul.f32 %v720, %v742
    %746 = vrot.lane.b32.xlu0 %v720, 64
    %v747 = vpop.permute.xlu0 %746
    %v749 = vmul.f32 %v720, %v747
    %751 = vrot.lane.b32.xlu0 %v749, 32
    %v752 = vpop.permute.xlu0 %751
    %v754 = vadd.f32 %v744, %v752
    %v755 = vtanh.pop %v754
    %757 = vrot.lane.b32.xlu0 %v755, 64
    %v758 = vpop.permute.xlu0 %757
    %v760 = vmul.f32 %v720, %v758
    %762 = vrot.lane.b32.xlu0 %v760, 32
    %v763 = vpop.permute.xlu0 %762
    %vm765 = vcmask 259076
    %766 = vst.msk [vmem:[#allocation2 - $0x2] sm:$0x30] %vm765, %v763
    %v768 = vrot.slane %v740, 4
    %769 = vrot.lane.b32.xlu0 %v768, 32
    %v770 = vpop.permute.xlu0 %769
    %v771 = vsel %vm226, %v770, 0
    %773 = vmatprep.subr.mxu0 0.0
    %774 = vmatpush1.msra.mxu0 0.0
    %775 = vmatprep.subr.mxu0 0.0
    %776 = vmatpush1.msra.mxu0 0.0
    %777 = vmatprep.subr.mxu0 0.0
    %778 = vmatpush1.msra.mxu0 0.0
    %779 = vmatprep.subr.mxu0 0.0
    %780 = vmatpush1.msra.mxu0 0.0
    %781 = vmatprep.subr.mxu0 0.0
    %782 = vmatpush1.msra.mxu0 0.0
    %783 = vmatprep.subr.mxu0 0.0
    %784 = vmatpush1.msra.mxu0 0.0
    %785 = vmatprep.subr.mxu0 0.0
    %786 = vmatpush1.msra.mxu0 0.0
    %787 = vmatprep.subr.mxu0 0.0
    %788 = vmatpush1.msra.mxu0 0.0
    %789 = vmatprep.subr.mxu0 0.0
    %790 = vmatpush1.msra.mxu0 0.0
    %791 = vmatprep.subr.mxu0 0.0
    %792 = vmatpush1.msra.mxu0 0.0
    %793 = vmatprep.subr.mxu0 0.0
    %794 = vmatpush1.msra.mxu0 0.0
    %795 = vmatprep.subr.mxu0 0.0
    %796 = vmatpush1.msra.mxu0 0.0
    %797 = vmatprep.subr.mxu0 %v188
    %798 = vmatpush1.msra.mxu0 %v187
    %799 = vmatprep.subr.mxu0 %v186
    %800 = vmatpush1.msra.mxu0 %v185
    %801 = vmatprep.subr.mxu0 %v184
    %802 = vmatpush1.msra.mxu0 %v183
    %803 = vmatprep.subr.mxu0 %v182
    %804 = vmatpush1.msra.mxu0 %v181
    %805 = vmatprep.subr.mxu0 0.0
    %806 = vmatpush2.msra.mxu0 0.0
    %807 = vmatprep.subr.mxu0 0.0
    %808 = vmatpush2.msra.mxu0 0.0
    %809 = vmatprep.subr.mxu0 0.0
    %810 = vmatpush2.msra.mxu0 0.0
    %811 = vmatprep.subr.mxu0 0.0
    %812 = vmatpush2.msra.mxu0 0.0
    %813 = vmatprep.subr.mxu0 0.0
    %814 = vmatpush2.msra.mxu0 0.0
    %815 = vmatprep.subr.mxu0 0.0
    %816 = vmatpush2.msra.mxu0 0.0
    %817 = vmatprep.subr.mxu0 0.0
    %818 = vmatpush2.msra.mxu0 0.0
    %819 = vmatprep.subr.mxu0 0.0
    %820 = vmatpush2.msra.mxu0 0.0
    %821 = vmatprep.subr.mxu0 0.0
    %822 = vmatpush2.msra.mxu0 0.0
    %823 = vmatprep.subr.mxu0 0.0
    %824 = vmatpush2.msra.mxu0 0.0
    %825 = vmatprep.subr.mxu0 0.0
    %826 = vmatpush2.msra.mxu0 0.0
    %827 = vmatprep.subr.mxu0 0.0
    %828 = vmatpush2.msra.mxu0 0.0
    %829 = vmatprep.subr.mxu0 0.0
    %830 = vmatpush2.msra.mxu0 0.0
    %831 = vmatprep.subr.mxu0 0.0
    %832 = vmatpush2.msra.mxu0 0.0
    %833 = vmatprep.subr.mxu0 0.0
    %834 = vmatpush2.msra.mxu0 0.0
    %835 = vmatprep.subr.mxu0 0.0
    %836 = vmatpush2.msra.mxu0 0.0
    %837 = vmatprep.mubr.f32.mxu0 0.0
    %838 = vmatmul.mubr.f32.gmra.mxu0 %v771
    %v839 = vpop.f32.mrf.mxu0
    %v840 = vadd.f32 0.0, %v839
    %v841 = vpop.f32.mrf.mxu0
    %v842 = vadd.f32 0.0, %v841
    %843 = vdwg.mxu0
    %v846 = vrot.slane %v840, 2
    %v847 = vrot.slane %v842, 2
    %v850 = vadd.f32 %v171, %v846
    %v851 = vadd.f32 %v173, %v847
    %v852 = vrot.slane %v760, 4
    %853 = vrot.lane.b32.xlu0 %v852, 32
    %v854 = vpop.permute.xlu0 %853
    %v855 = vsel %vm226, %v854, 0
    %857 = vmatprep.subr.mxu0 0.0
    %858 = vmatpush1.msra.mxu0 0.0
    %859 = vmatprep.subr.mxu0 0.0
    %860 = vmatpush1.msra.mxu0 0.0
    %861 = vmatprep.subr.mxu0 0.0
    %862 = vmatpush1.msra.mxu0 0.0
    %863 = vmatprep.subr.mxu0 0.0
    %864 = vmatpush1.msra.mxu0 0.0
    %865 = vmatprep.subr.mxu0 0.0
    %866 = vmatpush1.msra.mxu0 0.0
    %867 = vmatprep.subr.mxu0 0.0
    %868 = vmatpush1.msra.mxu0 0.0
    %869 = vmatprep.subr.mxu0 0.0
    %870 = vmatpush1.msra.mxu0 0.0
    %871 = vmatprep.subr.mxu0 0.0
    %872 = vmatpush1.msra.mxu0 0.0
    %873 = vmatprep.subr.mxu0 0.0
    %874 = vmatpush1.msra.mxu0 0.0
    %875 = vmatprep.subr.mxu0 0.0
    %876 = vmatpush1.msra.mxu0 0.0
    %877 = vmatprep.subr.mxu0 0.0
    %878 = vmatpush1.msra.mxu0 0.0
    %879 = vmatprep.subr.mxu0 0.0
    %880 = vmatpush1.msra.mxu0 0.0
    %881 = vmatprep.subr.mxu0 %v196
    %882 = vmatpush1.msra.mxu0 %v195
    %883 = vmatprep.subr.mxu0 %v194
    %884 = vmatpush1.msra.mxu0 %v193
    %885 = vmatprep.subr.mxu0 %v192
    %886 = vmatpush1.msra.mxu0 %v191
    %887 = vmatprep.subr.mxu0 %v190
    %888 = vmatpush1.msra.mxu0 %v189
    %889 = vmatprep.subr.mxu0 0.0
    %890 = vmatpush2.msra.mxu0 0.0
    %891 = vmatprep.subr.mxu0 0.0
    %892 = vmatpush2.msra.mxu0 0.0
    %893 = vmatprep.subr.mxu0 0.0
    %894 = vmatpush2.msra.mxu0 0.0
    %895 = vmatprep.subr.mxu0 0.0
    %896 = vmatpush2.msra.mxu0 0.0
    %897 = vmatprep.subr.mxu0 0.0
    %898 = vmatpush2.msra.mxu0 0.0
    %899 = vmatprep.subr.mxu0 0.0
    %900 = vmatpush2.msra.mxu0 0.0
    %901 = vmatprep.subr.mxu0 0.0
    %902 = vmatpush2.msra.mxu0 0.0
    %903 = vmatprep.subr.mxu0 0.0
    %904 = vmatpush2.msra.mxu0 0.0
    %905 = vmatprep.subr.mxu0 0.0
    %906 = vmatpush2.msra.mxu0 0.0
    %907 = vmatprep.subr.mxu0 0.0
    %908 = vmatpush2.msra.mxu0 0.0
    %909 = vmatprep.subr.mxu0 0.0
    %910 = vmatpush2.msra.mxu0 0.0
    %911 = vmatprep.subr.mxu0 0.0
    %912 = vmatpush2.msra.mxu0 0.0
    %913 = vmatprep.subr.mxu0 0.0
    %914 = vmatpush2.msra.mxu0 0.0
    %915 = vmatprep.subr.mxu0 0.0
    %916 = vmatpush2.msra.mxu0 0.0
    %917 = vmatprep.subr.mxu0 0.0
    %918 = vmatpush2.msra.mxu0 0.0
    %919 = vmatprep.subr.mxu0 0.0
    %920 = vmatpush2.msra.mxu0 0.0
    %921 = vmatprep.mubr.f32.mxu0 0.0
    %922 = vmatmul.mubr.f32.gmra.mxu0 %v855
    %v923 = vpop.f32.mrf.mxu0
    %v924 = vadd.f32 0.0, %v923
    %v925 = vpop.f32.mrf.mxu0
    %v926 = vadd.f32 0.0, %v925
    %927 = vdwg.mxu0
    %v930 = vrot.slane %v924, 2
    %v931 = vrot.slane %v926, 2
    %v934 = vadd.f32 %v850, %v930
    %v935 = vadd.f32 %v851, %v931
    %v936 = vtanh.pop %v934
    %v937 = vtanh.pop %v935
    %v938 = vmul.f32 %v936, %v201
    %v939 = vmul.f32 %v937, %v205
    %v940 = vadd.f32 %v938, %v212
    %v941 = vadd.f32 %v939, %v216
    %v943 = vrot.slane %v734, 6
    %v945 = vmul.f32 %v940, %v943
    %947 = vrot.lane.b32.xlu0 %v940, 64
    %v948 = vpop.permute.xlu0 %947
    %v950 = vmul.f32 %v940, %v948
    %952 = vrot.lane.b32.xlu0 %v950, 32
    %v953 = vpop.permute.xlu0 %952
    %v955 = vadd.f32 %v945, %v953
    %v956 = vtanh.pop %v955
    %958 = vrot.lane.b32.xlu0 %v956, 64
    %v959 = vpop.permute.xlu0 %958
    %v961 = vmul.f32 %v940, %v959
    %v963 = vrot.slane %v754, 6
    %v965 = vmul.f32 %v941, %v963
    %967 = vrot.lane.b32.xlu0 %v941, 64
    %v968 = vpop.permute.xlu0 %967
    %v970 = vmul.f32 %v941, %v968
    %972 = vrot.lane.b32.xlu0 %v970, 32
    %v973 = vpop.permute.xlu0 %972
    %v975 = vadd.f32 %v965, %v973
    %v976 = vtanh.pop %v975
    %978 = vrot.lane.b32.xlu0 %v976, 64
    %v979 = vpop.permute.xlu0 %978
    %v981 = vmul.f32 %v941, %v979
    %983 = vrot.lane.b32.xlu0 %v981, 32
    %v984 = vpop.permute.xlu0 %983
    %vm986 = vcmask 261126
    %987 = vst.msk [vmem:[#allocation2 - $0x2] sm:$0xc0] %vm986, %v984
    %v989 = vrot.slane %v961, 6
    %990 = vrot.lane.b32.xlu0 %v989, 32
    %v991 = vpop.permute.xlu0 %990
    %v992 = vsel %vm226, %v991, 0
    %994 = vmatprep.subr.mxu0 0.0
    %995 = vmatpush1.msra.mxu0 0.0
    %996 = vmatprep.subr.mxu0 0.0
    %997 = vmatpush1.msra.mxu0 0.0
    %998 = vmatprep.subr.mxu0 0.0
    %999 = vmatpush1.msra.mxu0 0.0
    %1000 = vmatprep.subr.mxu0 0.0
    %1001 = vmatpush1.msra.mxu0 0.0
    %1002 = vmatprep.subr.mxu0 0.0
    %1003 = vmatpush1.msra.mxu0 0.0
    %1004 = vmatprep.subr.mxu0 0.0
    %1005 = vmatpush1.msra.mxu0 0.0
    %1006 = vmatprep.subr.mxu0 0.0
    %1007 = vmatpush1.msra.mxu0 0.0
    %1008 = vmatprep.subr.mxu0 0.0
    %1009 = vmatpush1.msra.mxu0 0.0
    %1010 = vmatprep.subr.mxu0 0.0
    %1011 = vmatpush1.msra.mxu0 0.0
    %1012 = vmatprep.subr.mxu0 0.0
    %1013 = vmatpush1.msra.mxu0 0.0
    %1014 = vmatprep.subr.mxu0 0.0
    %1015 = vmatpush1.msra.mxu0 0.0
    %1016 = vmatprep.subr.mxu0 0.0
    %1017 = vmatpush1.msra.mxu0 0.0
    %1018 = vmatprep.subr.mxu0 %v188
    %1019 = vmatpush1.msra.mxu0 %v187
    %1020 = vmatprep.subr.mxu0 %v186
    %1021 = vmatpush1.msra.mxu0 %v185
    %1022 = vmatprep.subr.mxu0 %v184
    %1023 = vmatpush1.msra.mxu0 %v183
    %1024 = vmatprep.subr.mxu0 %v182
    %1025 = vmatpush1.msra.mxu0 %v181
    %1026 = vmatprep.subr.mxu0 0.0
    %1027 = vmatpush2.msra.mxu0 0.0
    %1028 = vmatprep.subr.mxu0 0.0
    %1029 = vmatpush2.msra.mxu0 0.0
    %1030 = vmatprep.subr.mxu0 0.0
    %1031 = vmatpush2.msra.mxu0 0.0
    %1032 = vmatprep.subr.mxu0 0.0
    %1033 = vmatpush2.msra.mxu0 0.0
    %1034 = vmatprep.subr.mxu0 0.0
    %1035 = vmatpush2.msra.mxu0 0.0
    %1036 = vmatprep.subr.mxu0 0.0
    %1037 = vmatpush2.msra.mxu0 0.0
    %1038 = vmatprep.subr.mxu0 0.0
    %1039 = vmatpush2.msra.mxu0 0.0
    %1040 = vmatprep.subr.mxu0 0.0
    %1041 = vmatpush2.msra.mxu0 0.0
    %1042 = vmatprep.subr.mxu0 0.0
    %1043 = vmatpush2.msra.mxu0 0.0
    %1044 = vmatprep.subr.mxu0 0.0
    %1045 = vmatpush2.msra.mxu0 0.0
    %1046 = vmatprep.subr.mxu0 0.0
    %1047 = vmatpush2.msra.mxu0 0.0
    %1048 = vmatprep.subr.mxu0 0.0
    %1049 = vmatpush2.msra.mxu0 0.0
    %1050 = vmatprep.subr.mxu0 0.0
    %1051 = vmatpush2.msra.mxu0 0.0
    %1052 = vmatprep.subr.mxu0 0.0
    %1053 = vmatpush2.msra.mxu0 0.0
    %1054 = vmatprep.subr.mxu0 0.0
    %1055 = vmatpush2.msra.mxu0 0.0
    %1056 = vmatprep.subr.mxu0 0.0
    %1057 = vmatpush2.msra.mxu0 0.0
    %1058 = vmatprep.mubr.f32.mxu0 0.0
    %1059 = vmatmul.mubr.f32.gmra.mxu0 %v992
    %v1060 = vpop.f32.mrf.mxu0
    %v1061 = vadd.f32 0.0, %v1060
    %v1062 = vpop.f32.mrf.mxu0
    %v1063 = vadd.f32 0.0, %v1062
    %1064 = vdwg.mxu0
    %v1065 = vadd.f32 %v177, %v1061
    %v1066 = vadd.f32 %v179, %v1063
    %v1067 = vrot.slane %v981, 6
    %1068 = vrot.lane.b32.xlu0 %v1067, 32
    %v1069 = vpop.permute.xlu0 %1068
    %v1070 = vsel %vm226, %v1069, 0
    %1072 = vmatprep.subr.mxu0 0.0
    %1073 = vmatpush1.msra.mxu0 0.0
    %1074 = vmatprep.subr.mxu0 0.0
    %1075 = vmatpush1.msra.mxu0 0.0
    %1076 = vmatprep.subr.mxu0 0.0
    %1077 = vmatpush1.msra.mxu0 0.0
    %1078 = vmatprep.subr.mxu0 0.0
    %1079 = vmatpush1.msra.mxu0 0.0
    %1080 = vmatprep.subr.mxu0 0.0
    %1081 = vmatpush1.msra.mxu0 0.0
    %1082 = vmatprep.subr.mxu0 0.0
    %1083 = vmatpush1.msra.mxu0 0.0
    %1084 = vmatprep.subr.mxu0 0.0
    %1085 = vmatpush1.msra.mxu0 0.0
    %1086 = vmatprep.subr.mxu0 0.0
    %1087 = vmatpush1.msra.mxu0 0.0
    %1088 = vmatprep.subr.mxu0 0.0
    %1089 = vmatpush1.msra.mxu0 0.0
    %1090 = vmatprep.subr.mxu0 0.0
    %1091 = vmatpush1.msra.mxu0 0.0
    %1092 = vmatprep.subr.mxu0 0.0
    %1093 = vmatpush1.msra.mxu0 0.0
    %1094 = vmatprep.subr.mxu0 0.0
    %1095 = vmatpush1.msra.mxu0 0.0
    %1096 = vmatprep.subr.mxu0 %v196
    %1097 = vmatpush1.msra.mxu0 %v195
    %1098 = vmatprep.subr.mxu0 %v194
    %1099 = vmatpush1.msra.mxu0 %v193
    %1100 = vmatprep.subr.mxu0 %v192
    %1101 = vmatpush1.msra.mxu0 %v191
    %1102 = vmatprep.subr.mxu0 %v190
    %1103 = vmatpush1.msra.mxu0 %v189
    %1104 = vmatprep.subr.mxu0 0.0
    %1105 = vmatpush2.msra.mxu0 0.0
    %1106 = vmatprep.subr.mxu0 0.0
    %1107 = vmatpush2.msra.mxu0 0.0
    %1108 = vmatprep.subr.mxu0 0.0
    %1109 = vmatpush2.msra.mxu0 0.0
    %1110 = vmatprep.subr.mxu0 0.0
    %1111 = vmatpush2.msra.mxu0 0.0
    %1112 = vmatprep.subr.mxu0 0.0
    %1113 = vmatpush2.msra.mxu0 0.0
    %1114 = vmatprep.subr.mxu0 0.0
    %1115 = vmatpush2.msra.mxu0 0.0
    %1116 = vmatprep.subr.mxu0 0.0
    %1117 = vmatpush2.msra.mxu0 0.0
    %1118 = vmatprep.subr.mxu0 0.0
    %1119 = vmatpush2.msra.mxu0 0.0
    %1120 = vmatprep.subr.mxu0 0.0
    %1121 = vmatpush2.msra.mxu0 0.0
    %1122 = vmatprep.subr.mxu0 0.0
    %1123 = vmatpush2.msra.mxu0 0.0
    %1124 = vmatprep.subr.mxu0 0.0
    %1125 = vmatpush2.msra.mxu0 0.0
    %1126 = vmatprep.subr.mxu0 0.0
    %1127 = vmatpush2.msra.mxu0 0.0
    %1128 = vmatprep.subr.mxu0 0.0
    %1129 = vmatpush2.msra.mxu0 0.0
    %1130 = vmatprep.subr.mxu0 0.0
    %1131 = vmatpush2.msra.mxu0 0.0
    %1132 = vmatprep.subr.mxu0 0.0
    %1133 = vmatpush2.msra.mxu0 0.0
    %1134 = vmatprep.subr.mxu0 0.0
    %1135 = vmatpush2.msra.mxu0 0.0
    %1136 = vmatprep.mubr.f32.mxu0 0.0
    %1137 = vmatmul.mubr.f32.gmra.mxu0 %v1070
    %v1138 = vpop.f32.mrf.mxu0
    %v1139 = vadd.f32 0.0, %v1138
    %v1140 = vpop.f32.mrf.mxu0
    %v1141 = vadd.f32 0.0, %v1140
    %1142 = vdwg.mxu0
    %v1143 = vadd.f32 %v1065, %v1139
    %v1144 = vadd.f32 %v1066, %v1141
    %v1145 = vtanh.pop %v1143
    %v1146 = vtanh.pop %v1144
    %v1147 = vmul.f32 %v1145, %v201
    %v1148 = vmul.f32 %v1146, %v205
    %v1149 = vadd.f32 %v1147, %v212
    %v1150 = vadd.f32 %v1148, %v216
    %v1152 = vrot.slane %v955, 6
    %v1154 = vmul.f32 %v1149, %v1152
    %1156 = vrot.lane.b32.xlu0 %v1149, 64
    %v1157 = vpop.permute.xlu0 %1156
    %v1159 = vmul.f32 %v1149, %v1157
    %1161 = vrot.lane.b32.xlu0 %v1159, 32
    %v1162 = vpop.permute.xlu0 %1161
    %v1164 = vadd.f32 %v1154, %v1162
    %v1165 = vtanh.pop %v1164
    %1167 = vrot.lane.b32.xlu0 %v1165, 64
    %v1168 = vpop.permute.xlu0 %1167
    %v1170 = vmul.f32 %v1149, %v1168
    %v1172 = vrot.slane %v975, 6
    %v1174 = vmul.f32 %v1150, %v1172
    %1176 = vrot.lane.b32.xlu0 %v1150, 64
    %v1177 = vpop.permute.xlu0 %1176
    %v1179 = vmul.f32 %v1150, %v1177
    %1181 = vrot.lane.b32.xlu0 %v1179, 32
    %v1182 = vpop.permute.xlu0 %1181
    %v1184 = vadd.f32 %v1174, %v1182
    %v1185 = vtanh.pop %v1184
    %1187 = vrot.lane.b32.xlu0 %v1185, 64
    %v1188 = vpop.permute.xlu0 %1187
    %v1190 = vmul.f32 %v1150, %v1188
    %1192 = vrot.lane.b32.xlu0 %v1190, 32
    %v1193 = vpop.permute.xlu0 %1192
    %vm1195 = vcmask 254976
    %1196 = vst.msk [vmem:[#allocation2 + $0x6] sm:$0x3] %vm1195, %v1193
    %1198 = vrot.lane.b32.xlu0 %v1170, 32
    %v1199 = vpop.permute.xlu0 %1198
    %v1200 = vsel %vm226, %v1199, 0
    %1202 = vmatprep.subr.mxu0 0.0
    %1203 = vmatpush1.msra.mxu0 0.0
    %1204 = vmatprep.subr.mxu0 0.0
    %1205 = vmatpush1.msra.mxu0 0.0
    %1206 = vmatprep.subr.mxu0 0.0
    %1207 = vmatpush1.msra.mxu0 0.0
    %1208 = vmatprep.subr.mxu0 0.0
    %1209 = vmatpush1.msra.mxu0 0.0
    %1210 = vmatprep.subr.mxu0 0.0
    %1211 = vmatpush1.msra.mxu0 0.0
    %1212 = vmatprep.subr.mxu0 0.0
    %1213 = vmatpush1.msra.mxu0 0.0
    %1214 = vmatprep.subr.mxu0 0.0
    %1215 = vmatpush1.msra.mxu0 0.0
    %1216 = vmatprep.subr.mxu0 0.0
    %1217 = vmatpush1.msra.mxu0 0.0
    %1218 = vmatprep.subr.mxu0 0.0
    %1219 = vmatpush1.msra.mxu0 0.0
    %1220 = vmatprep.subr.mxu0 0.0
    %1221 = vmatpush1.msra.mxu0 0.0
    %1222 = vmatprep.subr.mxu0 0.0
    %1223 = vmatpush1.msra.mxu0 0.0
    %1224 = vmatprep.subr.mxu0 0.0
    %1225 = vmatpush1.msra.mxu0 0.0
    %1226 = vmatprep.subr.mxu0 %v188
    %1227 = vmatpush1.msra.mxu0 %v187
    %1228 = vmatprep.subr.mxu0 %v186
    %1229 = vmatpush1.msra.mxu0 %v185
    %1230 = vmatprep.subr.mxu0 %v184
    %1231 = vmatpush1.msra.mxu0 %v183
    %1232 = vmatprep.subr.mxu0 %v182
    %1233 = vmatpush1.msra.mxu0 %v181
    %1234 = vmatprep.subr.mxu0 0.0
    %1235 = vmatpush2.msra.mxu0 0.0
    %1236 = vmatprep.subr.mxu0 0.0
    %1237 = vmatpush2.msra.mxu0 0.0
    %1238 = vmatprep.subr.mxu0 0.0
    %1239 = vmatpush2.msra.mxu0 0.0
    %1240 = vmatprep.subr.mxu0 0.0
    %1241 = vmatpush2.msra.mxu0 0.0
    %1242 = vmatprep.subr.mxu0 0.0
    %1243 = vmatpush2.msra.mxu0 0.0
    %1244 = vmatprep.subr.mxu0 0.0
    %1245 = vmatpush2.msra.mxu0 0.0
    %1246 = vmatprep.subr.mxu0 0.0
    %1247 = vmatpush2.msra.mxu0 0.0
    %1248 = vmatprep.subr.mxu0 0.0
    %1249 = vmatpush2.msra.mxu0 0.0
    %1250 = vmatprep.subr.mxu0 0.0
    %1251 = vmatpush2.msra.mxu0 0.0
    %1252 = vmatprep.subr.mxu0 0.0
    %1253 = vmatpush2.msra.mxu0 0.0
    %1254 = vmatprep.subr.mxu0 0.0
    %1255 = vmatpush2.msra.mxu0 0.0
    %1256 = vmatprep.subr.mxu0 0.0
    %1257 = vmatpush2.msra.mxu0 0.0
    %1258 = vmatprep.subr.mxu0 0.0
    %1259 = vmatpush2.msra.mxu0 0.0
    %1260 = vmatprep.subr.mxu0 0.0
    %1261 = vmatpush2.msra.mxu0 0.0
    %1262 = vmatprep.subr.mxu0 0.0
    %1263 = vmatpush2.msra.mxu0 0.0
    %1264 = vmatprep.subr.mxu0 0.0
    %1265 = vmatpush2.msra.mxu0 0.0
    %1266 = vmatprep.mubr.f32.mxu0 0.0
    %1267 = vmatmul.mubr.f32.gmra.mxu0 %v1200
    %v1268 = vpop.f32.mrf.mxu0
    %v1269 = vadd.f32 0.0, %v1268
    %v1270 = vpop.f32.mrf.mxu0
    %v1271 = vadd.f32 0.0, %v1270
    %1272 = vdwg.mxu0
    %v1275 = vrot.slane %v1269, 6
    %v1276 = vrot.slane %v1271, 6
    %v1279 = vadd.f32 %v177, %v1275
    %v1280 = vadd.f32 %v179, %v1276
    %v1281 = vsel %vm226, %v1193, 0
    %1283 = vmatprep.subr.mxu0 0.0
    %1284 = vmatpush1.msra.mxu0 0.0
    %1285 = vmatprep.subr.mxu0 0.0
    %1286 = vmatpush1.msra.mxu0 0.0
    %1287 = vmatprep.subr.mxu0 0.0
    %1288 = vmatpush1.msra.mxu0 0.0
    %1289 = vmatprep.subr.mxu0 0.0
    %1290 = vmatpush1.msra.mxu0 0.0
    %1291 = vmatprep.subr.mxu0 0.0
    %1292 = vmatpush1.msra.mxu0 0.0
    %1293 = vmatprep.subr.mxu0 0.0
    %1294 = vmatpush1.msra.mxu0 0.0
    %1295 = vmatprep.subr.mxu0 0.0
    %1296 = vmatpush1.msra.mxu0 0.0
    %1297 = vmatprep.subr.mxu0 0.0
    %1298 = vmatpush1.msra.mxu0 0.0
    %1299 = vmatprep.subr.mxu0 0.0
    %1300 = vmatpush1.msra.mxu0 0.0
    %1301 = vmatprep.subr.mxu0 0.0
    %1302 = vmatpush1.msra.mxu0 0.0
    %1303 = vmatprep.subr.mxu0 0.0
    %1304 = vmatpush1.msra.mxu0 0.0
    %1305 = vmatprep.subr.mxu0 0.0
    %1306 = vmatpush1.msra.mxu0 0.0
    %1307 = vmatprep.subr.mxu0 %v196
    %1308 = vmatpush1.msra.mxu0 %v195
    %1309 = vmatprep.subr.mxu0 %v194
    %1310 = vmatpush1.msra.mxu0 %v193
    %1311 = vmatprep.subr.mxu0 %v192
    %1312 = vmatpush1.msra.mxu0 %v191
    %1313 = vmatprep.subr.mxu0 %v190
    %1314 = vmatpush1.msra.mxu0 %v189
    %1315 = vmatprep.subr.mxu0 0.0
    %1316 = vmatpush2.msra.mxu0 0.0
    %1317 = vmatprep.subr.mxu0 0.0
    %1318 = vmatpush2.msra.mxu0 0.0
    %1319 = vmatprep.subr.mxu0 0.0
    %1320 = vmatpush2.msra.mxu0 0.0
    %1321 = vmatprep.subr.mxu0 0.0
    %1322 = vmatpush2.msra.mxu0 0.0
    %1323 = vmatprep.subr.mxu0 0.0
    %1324 = vmatpush2.msra.mxu0 0.0
    %1325 = vmatprep.subr.mxu0 0.0
    %1326 = vmatpush2.msra.mxu0 0.0
    %1327 = vmatprep.subr.mxu0 0.0
    %1328 = vmatpush2.msra.mxu0 0.0
    %1329 = vmatprep.subr.mxu0 0.0
    %1330 = vmatpush2.msra.mxu0 0.0
    %1331 = vmatprep.subr.mxu0 0.0
    %1332 = vmatpush2.msra.mxu0 0.0
    %1333 = vmatprep.subr.mxu0 0.0
    %1334 = vmatpush2.msra.mxu0 0.0
    %1335 = vmatprep.subr.mxu0 0.0
    %1336 = vmatpush2.msra.mxu0 0.0
    %1337 = vmatprep.subr.mxu0 0.0
    %1338 = vmatpush2.msra.mxu0 0.0
    %1339 = vmatprep.subr.mxu0 0.0
    %1340 = vmatpush2.msra.mxu0 0.0
    %1341 = vmatprep.subr.mxu0 0.0
    %1342 = vmatpush2.msra.mxu0 0.0
    %1343 = vmatprep.subr.mxu0 0.0
    %1344 = vmatpush2.msra.mxu0 0.0
    %1345 = vmatprep.subr.mxu0 0.0
    %1346 = vmatpush2.msra.mxu0 0.0
    %1347 = vmatprep.mubr.f32.mxu0 0.0
    %1348 = vmatmul.mubr.f32.gmra.mxu0 %v1281
    %v1349 = vpop.f32.mrf.mxu0
    %v1350 = vadd.f32 0.0, %v1349
    %v1351 = vpop.f32.mrf.mxu0
    %v1352 = vadd.f32 0.0, %v1351
    %1353 = vdwg.mxu0
    %v1356 = vrot.slane %v1350, 6
    %v1357 = vrot.slane %v1352, 6
    %v1360 = vadd.f32 %v1279, %v1356
    %v1361 = vadd.f32 %v1280, %v1357
    %v1362 = vtanh.pop %v1360
    %v1363 = vtanh.pop %v1361
    %v1364 = vmul.f32 %v1362, %v201
    %v1365 = vmul.f32 %v1363, %v205
    %v1366 = vadd.f32 %v1364, %v212
    %v1367 = vadd.f32 %v1365, %v216
    %v1369 = vrot.slane %v1164, 6
    %v1371 = vmul.f32 %v1366, %v1369
    %1373 = vrot.lane.b32.xlu0 %v1366, 64
    %v1374 = vpop.permute.xlu0 %1373
    %v1376 = vmul.f32 %v1366, %v1374
    %1378 = vrot.lane.b32.xlu0 %v1376, 32
    %v1379 = vpop.permute.xlu0 %1378
    %v1381 = vadd.f32 %v1371, %v1379
    %v1382 = vtanh.pop %v1381
    %1384 = vrot.lane.b32.xlu0 %v1382, 64
    %v1385 = vpop.permute.xlu0 %1384
    %v1387 = vmul.f32 %v1366, %v1385
    %v1389 = vrot.slane %v1184, 6
    %v1391 = vmul.f32 %v1367, %v1389
    %1393 = vrot.lane.b32.xlu0 %v1367, 64
    %v1394 = vpop.permute.xlu0 %1393
    %v1396 = vmul.f32 %v1367, %v1394
    %1398 = vrot.lane.b32.xlu0 %v1396, 32
    %v1399 = vpop.permute.xlu0 %1398
    %v1401 = vadd.f32 %v1391, %v1399
    %v1402 = vtanh.pop %v1401
    %1404 = vrot.lane.b32.xlu0 %v1402, 64
    %v1405 = vpop.permute.xlu0 %1404
    %v1407 = vmul.f32 %v1367, %v1405
    %1409 = vrot.lane.b32.xlu0 %v1407, 32
    %v1410 = vpop.permute.xlu0 %1409
    %1412 = vst.msk [vmem:[#allocation2 + $0x6] sm:$0xc] %vm544, %v1410
    %v1414 = vrot.slane %v1387, 2
    %1415 = vrot.lane.b32.xlu0 %v1414, 32
    %v1416 = vpop.permute.xlu0 %1415
    %v1417 = vsel %vm226, %v1416, 0
    %1419 = vmatprep.subr.mxu0 0.0
    %1420 = vmatpush1.msra.mxu0 0.0
    %1421 = vmatprep.subr.mxu0 0.0
    %1422 = vmatpush1.msra.mxu0 0.0
    %1423 = vmatprep.subr.mxu0 0.0
    %1424 = vmatpush1.msra.mxu0 0.0
    %1425 = vmatprep.subr.mxu0 0.0
    %1426 = vmatpush1.msra.mxu0 0.0
    %1427 = vmatprep.subr.mxu0 0.0
    %1428 = vmatpush1.msra.mxu0 0.0
    %1429 = vmatprep.subr.mxu0 0.0
    %1430 = vmatpush1.msra.mxu0 0.0
    %1431 = vmatprep.subr.mxu0 0.0
    %1432 = vmatpush1.msra.mxu0 0.0
    %1433 = vmatprep.subr.mxu0 0.0
    %1434 = vmatpush1.msra.mxu0 0.0
    %1435 = vmatprep.subr.mxu0 0.0
    %1436 = vmatpush1.msra.mxu0 0.0
    %1437 = vmatprep.subr.mxu0 0.0
    %1438 = vmatpush1.msra.mxu0 0.0
    %1439 = vmatprep.subr.mxu0 0.0
    %1440 = vmatpush1.msra.mxu0 0.0
    %1441 = vmatprep.subr.mxu0 0.0
    %1442 = vmatpush1.msra.mxu0 0.0
    %1443 = vmatprep.subr.mxu0 %v188
    %1444 = vmatpush1.msra.mxu0 %v187
    %1445 = vmatprep.subr.mxu0 %v186
    %1446 = vmatpush1.msra.mxu0 %v185
    %1447 = vmatprep.subr.mxu0 %v184
    %1448 = vmatpush1.msra.mxu0 %v183
    %1449 = vmatprep.subr.mxu0 %v182
    %1450 = vmatpush1.msra.mxu0 %v181
    %1451 = vmatprep.subr.mxu0 0.0
    %1452 = vmatpush2.msra.mxu0 0.0
    %1453 = vmatprep.subr.mxu0 0.0
    %1454 = vmatpush2.msra.mxu0 0.0
    %1455 = vmatprep.subr.mxu0 0.0
    %1456 = vmatpush2.msra.mxu0 0.0
    %1457 = vmatprep.subr.mxu0 0.0
    %1458 = vmatpush2.msra.mxu0 0.0
    %1459 = vmatprep.subr.mxu0 0.0
    %1460 = vmatpush2.msra.mxu0 0.0
    %1461 = vmatprep.subr.mxu0 0.0
    %1462 = vmatpush2.msra.mxu0 0.0
    %1463 = vmatprep.subr.mxu0 0.0
    %1464 = vmatpush2.msra.mxu0 0.0
    %1465 = vmatprep.subr.mxu0 0.0
    %1466 = vmatpush2.msra.mxu0 0.0
    %1467 = vmatprep.subr.mxu0 0.0
    %1468 = vmatpush2.msra.mxu0 0.0
    %1469 = vmatprep.subr.mxu0 0.0
    %1470 = vmatpush2.msra.mxu0 0.0
    %1471 = vmatprep.subr.mxu0 0.0
    %1472 = vmatpush2.msra.mxu0 0.0
    %1473 = vmatprep.subr.mxu0 0.0
    %1474 = vmatpush2.msra.mxu0 0.0
    %1475 = vmatprep.subr.mxu0 0.0
    %1476 = vmatpush2.msra.mxu0 0.0
    %1477 = vmatprep.subr.mxu0 0.0
    %1478 = vmatpush2.msra.mxu0 0.0
    %1479 = vmatprep.subr.mxu0 0.0
    %1480 = vmatpush2.msra.mxu0 0.0
    %1481 = vmatprep.subr.mxu0 0.0
    %1482 = vmatpush2.msra.mxu0 0.0
    %1483 = vmatprep.mubr.f32.mxu0 0.0
    %1484 = vmatmul.mubr.f32.gmra.mxu0 %v1417
    %v1485 = vpop.f32.mrf.mxu0
    %v1486 = vadd.f32 0.0, %v1485
    %v1487 = vpop.f32.mrf.mxu0
    %v1488 = vadd.f32 0.0, %v1487
    %1489 = vdwg.mxu0
    %v1492 = vrot.slane %v1486, 4
    %v1493 = vrot.slane %v1488, 4
    %v1496 = vadd.f32 %v177, %v1492
    %v1497 = vadd.f32 %v179, %v1493
    %v1498 = vrot.slane %v1407, 2
    %1499 = vrot.lane.b32.xlu0 %v1498, 32
    %v1500 = vpop.permute.xlu0 %1499
    %v1501 = vsel %vm226, %v1500, 0
    %1503 = vmatprep.subr.mxu0 0.0
    %1504 = vmatpush1.msra.mxu0 0.0
    %1505 = vmatprep.subr.mxu0 0.0
    %1506 = vmatpush1.msra.mxu0 0.0
    %1507 = vmatprep.subr.mxu0 0.0
    %1508 = vmatpush1.msra.mxu0 0.0
    %1509 = vmatprep.subr.mxu0 0.0
    %1510 = vmatpush1.msra.mxu0 0.0
    %1511 = vmatprep.subr.mxu0 0.0
    %1512 = vmatpush1.msra.mxu0 0.0
    %1513 = vmatprep.subr.mxu0 0.0
    %1514 = vmatpush1.msra.mxu0 0.0
    %1515 = vmatprep.subr.mxu0 0.0
    %1516 = vmatpush1.msra.mxu0 0.0
    %1517 = vmatprep.subr.mxu0 0.0
    %1518 = vmatpush1.msra.mxu0 0.0
    %1519 = vmatprep.subr.mxu0 0.0
    %1520 = vmatpush1.msra.mxu0 0.0
    %1521 = vmatprep.subr.mxu0 0.0
    %1522 = vmatpush1.msra.mxu0 0.0
    %1523 = vmatprep.subr.mxu0 0.0
    %1524 = vmatpush1.msra.mxu0 0.0
    %1525 = vmatprep.subr.mxu0 0.0
    %1526 = vmatpush1.msra.mxu0 0.0
    %1527 = vmatprep.subr.mxu0 %v196
    %1528 = vmatpush1.msra.mxu0 %v195
    %1529 = vmatprep.subr.mxu0 %v194
    %1530 = vmatpush1.msra.mxu0 %v193
    %1531 = vmatprep.subr.mxu0 %v192
    %1532 = vmatpush1.msra.mxu0 %v191
    %1533 = vmatprep.subr.mxu0 %v190
    %1534 = vmatpush1.msra.mxu0 %v189
    %1535 = vmatprep.subr.mxu0 0.0
    %1536 = vmatpush2.msra.mxu0 0.0
    %1537 = vmatprep.subr.mxu0 0.0
    %1538 = vmatpush2.msra.mxu0 0.0
    %1539 = vmatprep.subr.mxu0 0.0
    %1540 = vmatpush2.msra.mxu0 0.0
    %1541 = vmatprep.subr.mxu0 0.0
    %1542 = vmatpush2.msra.mxu0 0.0
    %1543 = vmatprep.subr.mxu0 0.0
    %1544 = vmatpush2.msra.mxu0 0.0
    %1545 = vmatprep.subr.mxu0 0.0
    %1546 = vmatpush2.msra.mxu0 0.0
    %1547 = vmatprep.subr.mxu0 0.0
    %1548 = vmatpush2.msra.mxu0 0.0
    %1549 = vmatprep.subr.mxu0 0.0
    %1550 = vmatpush2.msra.mxu0 0.0
    %1551 = vmatprep.subr.mxu0 0.0
    %1552 = vmatpush2.msra.mxu0 0.0
    %1553 = vmatprep.subr.mxu0 0.0
    %1554 = vmatpush2.msra.mxu0 0.0
    %1555 = vmatprep.subr.mxu0 0.0
    %1556 = vmatpush2.msra.mxu0 0.0
    %1557 = vmatprep.subr.mxu0 0.0
    %1558 = vmatpush2.msra.mxu0 0.0
    %1559 = vmatprep.subr.mxu0 0.0
    %1560 = vmatpush2.msra.mxu0 0.0
    %1561 = vmatprep.subr.mxu0 0.0
    %1562 = vmatpush2.msra.mxu0 0.0
    %1563 = vmatprep.subr.mxu0 0.0
    %1564 = vmatpush2.msra.mxu0 0.0
    %1565 = vmatprep.subr.mxu0 0.0
    %1566 = vmatpush2.msra.mxu0 0.0
    %1567 = vmatprep.mubr.f32.mxu0 0.0
    %1568 = vmatmul.mubr.f32.gmra.mxu0 %v1501
    %v1569 = vpop.f32.mrf.mxu0
    %v1570 = vadd.f32 0.0, %v1569
    %v1571 = vpop.f32.mrf.mxu0
    %v1572 = vadd.f32 0.0, %v1571
    %1573 = vdwg.mxu0
    %v1576 = vrot.slane %v1570, 4
    %v1577 = vrot.slane %v1572, 4
    %v1580 = vadd.f32 %v1496, %v1576
    %v1581 = vadd.f32 %v1497, %v1577
    %v1582 = vtanh.pop %v1580
    %v1583 = vtanh.pop %v1581
    %v1584 = vmul.f32 %v1582, %v201
    %v1585 = vmul.f32 %v1583, %v205
    %v1586 = vadd.f32 %v1584, %v212
    %v1587 = vadd.f32 %v1585, %v216
    %v1589 = vrot.slane %v1381, 6
    %v1591 = vmul.f32 %v1586, %v1589
    %1593 = vrot.lane.b32.xlu0 %v1586, 64
    %v1594 = vpop.permute.xlu0 %1593
    %v1596 = vmul.f32 %v1586, %v1594
    %1598 = vrot.lane.b32.xlu0 %v1596, 32
    %v1599 = vpop.permute.xlu0 %1598
    %v1601 = vadd.f32 %v1591, %v1599
    %v1602 = vtanh.pop %v1601
    %1604 = vrot.lane.b32.xlu0 %v1602, 64
    %v1605 = vpop.permute.xlu0 %1604
    %v1607 = vmul.f32 %v1586, %v1605
    %v1609 = vrot.slane %v1401, 6
    %v1611 = vmul.f32 %v1587, %v1609
    %1613 = vrot.lane.b32.xlu0 %v1587, 64
    %v1614 = vpop.permute.xlu0 %1613
    %v1616 = vmul.f32 %v1587, %v1614
    %1618 = vrot.lane.b32.xlu0 %v1616, 32
    %v1619 = vpop.permute.xlu0 %1618
    %v1621 = vadd.f32 %v1611, %v1619
    %v1622 = vtanh.pop %v1621
    %1624 = vrot.lane.b32.xlu0 %v1622, 64
    %v1625 = vpop.permute.xlu0 %1624
    %v1627 = vmul.f32 %v1587, %v1625
    %1629 = vrot.lane.b32.xlu0 %v1627, 32
    %v1630 = vpop.permute.xlu0 %1629
    %1632 = vst.msk [vmem:[#allocation2 + $0x6] sm:$0x30] %vm765, %v1630
    %v1634 = vrot.slane %v1607, 4
    %1635 = vrot.lane.b32.xlu0 %v1634, 32
    %v1636 = vpop.permute.xlu0 %1635
    %v1637 = vsel %vm226, %v1636, 0
    %1639 = vmatprep.subr.mxu0 0.0
    %1640 = vmatpush1.msra.mxu0 0.0
    %1641 = vmatprep.subr.mxu0 0.0
    %1642 = vmatpush1.msra.mxu0 0.0
    %1643 = vmatprep.subr.mxu0 0.0
    %1644 = vmatpush1.msra.mxu0 0.0
    %1645 = vmatprep.subr.mxu0 0.0
    %1646 = vmatpush1.msra.mxu0 0.0
    %1647 = vmatprep.subr.mxu0 0.0
    %1648 = vmatpush1.msra.mxu0 0.0
    %1649 = vmatprep.subr.mxu0 0.0
    %1650 = vmatpush1.msra.mxu0 0.0
    %1651 = vmatprep.subr.mxu0 0.0
    %1652 = vmatpush1.msra.mxu0 0.0
    %1653 = vmatprep.subr.mxu0 0.0
    %1654 = vmatpush1.msra.mxu0 0.0
    %1655 = vmatprep.subr.mxu0 0.0
    %1656 = vmatpush1.msra.mxu0 0.0
    %1657 = vmatprep.subr.mxu0 0.0
    %1658 = vmatpush1.msra.mxu0 0.0
    %1659 = vmatprep.subr.mxu0 0.0
    %1660 = vmatpush1.msra.mxu0 0.0
    %1661 = vmatprep.subr.mxu0 0.0
    %1662 = vmatpush1.msra.mxu0 0.0
    %1663 = vmatprep.subr.mxu0 %v188
    %1664 = vmatpush1.msra.mxu0 %v187
    %1665 = vmatprep.subr.mxu0 %v186
    %1666 = vmatpush1.msra.mxu0 %v185
    %1667 = vmatprep.subr.mxu0 %v184
    %1668 = vmatpush1.msra.mxu0 %v183
    %1669 = vmatprep.subr.mxu0 %v182
    %1670 = vmatpush1.msra.mxu0 %v181
    %1671 = vmatprep.subr.mxu0 0.0
    %1672 = vmatpush2.msra.mxu0 0.0
    %1673 = vmatprep.subr.mxu0 0.0
    %1674 = vmatpush2.msra.mxu0 0.0
    %1675 = vmatprep.subr.mxu0 0.0
    %1676 = vmatpush2.msra.mxu0 0.0
    %1677 = vmatprep.subr.mxu0 0.0
    %1678 = vmatpush2.msra.mxu0 0.0
    %1679 = vmatprep.subr.mxu0 0.0
    %1680 = vmatpush2.msra.mxu0 0.0
    %1681 = vmatprep.subr.mxu0 0.0
    %1682 = vmatpush2.msra.mxu0 0.0
    %1683 = vmatprep.subr.mxu0 0.0
    %1684 = vmatpush2.msra.mxu0 0.0
    %1685 = vmatprep.subr.mxu0 0.0
    %1686 = vmatpush2.msra.mxu0 0.0
    %1687 = vmatprep.subr.mxu0 0.0
    %1688 = vmatpush2.msra.mxu0 0.0
    %1689 = vmatprep.subr.mxu0 0.0
    %1690 = vmatpush2.msra.mxu0 0.0
    %1691 = vmatprep.subr.mxu0 0.0
    %1692 = vmatpush2.msra.mxu0 0.0
    %1693 = vmatprep.subr.mxu0 0.0
    %1694 = vmatpush2.msra.mxu0 0.0
    %1695 = vmatprep.subr.mxu0 0.0
    %1696 = vmatpush2.msra.mxu0 0.0
    %1697 = vmatprep.subr.mxu0 0.0
    %1698 = vmatpush2.msra.mxu0 0.0
    %1699 = vmatprep.subr.mxu0 0.0
    %1700 = vmatpush2.msra.mxu0 0.0
    %1701 = vmatprep.subr.mxu0 0.0
    %1702 = vmatpush2.msra.mxu0 0.0
    %1703 = vmatprep.mubr.f32.mxu0 0.0
    %1704 = vmatmul.mubr.f32.gmra.mxu0 %v1637
    %v1705 = vpop.f32.mrf.mxu0
    %v1706 = vadd.f32 0.0, %v1705
    %v1707 = vpop.f32.mrf.mxu0
    %v1708 = vadd.f32 0.0, %v1707
    %1709 = vdwg.mxu0
    %v1712 = vrot.slane %v1706, 2
    %v1713 = vrot.slane %v1708, 2
    %v1716 = vadd.f32 %v177, %v1712
    %v1717 = vadd.f32 %v179, %v1713
    %v1718 = vrot.slane %v1627, 4
    %1719 = vrot.lane.b32.xlu0 %v1718, 32
    %v1720 = vpop.permute.xlu0 %1719
    %v1721 = vsel %vm226, %v1720, 0
    %1723 = vmatprep.subr.mxu0 0.0
    %1724 = vmatpush1.msra.mxu0 0.0
    %1725 = vmatprep.subr.mxu0 0.0
    %1726 = vmatpush1.msra.mxu0 0.0
    %1727 = vmatprep.subr.mxu0 0.0
    %1728 = vmatpush1.msra.mxu0 0.0
    %1729 = vmatprep.subr.mxu0 0.0
    %1730 = vmatpush1.msra.mxu0 0.0
    %1731 = vmatprep.subr.mxu0 0.0
    %1732 = vmatpush1.msra.mxu0 0.0
    %1733 = vmatprep.subr.mxu0 0.0
    %1734 = vmatpush1.msra.mxu0 0.0
    %1735 = vmatprep.subr.mxu0 0.0
    %1736 = vmatpush1.msra.mxu0 0.0
    %1737 = vmatprep.subr.mxu0 0.0
    %1738 = vmatpush1.msra.mxu0 0.0
    %1739 = vmatprep.subr.mxu0 0.0
    %1740 = vmatpush1.msra.mxu0 0.0
    %1741 = vmatprep.subr.mxu0 0.0
    %1742 = vmatpush1.msra.mxu0 0.0
    %1743 = vmatprep.subr.mxu0 0.0
    %1744 = vmatpush1.msra.mxu0 0.0
    %1745 = vmatprep.subr.mxu0 0.0
    %1746 = vmatpush1.msra.mxu0 0.0
    %1747 = vmatprep.subr.mxu0 %v196
    %1748 = vmatpush1.msra.mxu0 %v195
    %1749 = vmatprep.subr.mxu0 %v194
    %1750 = vmatpush1.msra.mxu0 %v193
    %1751 = vmatprep.subr.mxu0 %v192
    %1752 = vmatpush1.msra.mxu0 %v191
    %1753 = vmatprep.subr.mxu0 %v190
    %1754 = vmatpush1.msra.mxu0 %v189
    %1755 = vmatprep.subr.mxu0 0.0
    %1756 = vmatpush2.msra.mxu0 0.0
    %1757 = vmatprep.subr.mxu0 0.0
    %1758 = vmatpush2.msra.mxu0 0.0
    %1759 = vmatprep.subr.mxu0 0.0
    %1760 = vmatpush2.msra.mxu0 0.0
    %1761 = vmatprep.subr.mxu0 0.0
    %1762 = vmatpush2.msra.mxu0 0.0
    %1763 = vmatprep.subr.mxu0 0.0
    %1764 = vmatpush2.msra.mxu0 0.0
    %1765 = vmatprep.subr.mxu0 0.0
    %1766 = vmatpush2.msra.mxu0 0.0
    %1767 = vmatprep.subr.mxu0 0.0
    %1768 = vmatpush2.msra.mxu0 0.0
    %1769 = vmatprep.subr.mxu0 0.0
    %1770 = vmatpush2.msra.mxu0 0.0
    %1771 = vmatprep.subr.mxu0 0.0
    %1772 = vmatpush2.msra.mxu0 0.0
    %1773 = vmatprep.subr.mxu0 0.0
    %1774 = vmatpush2.msra.mxu0 0.0
    %1775 = vmatprep.subr.mxu0 0.0
    %1776 = vmatpush2.msra.mxu0 0.0
    %1777 = vmatprep.subr.mxu0 0.0
    %1778 = vmatpush2.msra.mxu0 0.0
    %1779 = vmatprep.subr.mxu0 0.0
    %1780 = vmatpush2.msra.mxu0 0.0
    %1781 = vmatprep.subr.mxu0 0.0
    %1782 = vmatpush2.msra.mxu0 0.0
    %1783 = vmatprep.subr.mxu0 0.0
    %1784 = vmatpush2.msra.mxu0 0.0
    %1785 = vmatprep.subr.mxu0 0.0
    %1786 = vmatpush2.msra.mxu0 0.0
    %1787 = vmatprep.mubr.f32.mxu0 0.0
    %1788 = vmatmul.mubr.f32.gmra.mxu0 %v1721
    %v1789 = vpop.f32.mrf.mxu0
    %v1790 = vadd.f32 0.0, %v1789
    %v1791 = vpop.f32.mrf.mxu0
    %v1792 = vadd.f32 0.0, %v1791
    %1793 = vdwg.mxu0
    %v1796 = vrot.slane %v1790, 2
    %v1797 = vrot.slane %v1792, 2
    %v1800 = vadd.f32 %v1716, %v1796
    %v1801 = vadd.f32 %v1717, %v1797
    %v1802 = vtanh.pop %v1800
    %v1803 = vtanh.pop %v1801
    %v1804 = vmul.f32 %v1802, %v201
    %v1805 = vmul.f32 %v1803, %v205
    %v1806 = vadd.f32 %v1804, %v212
    %v1807 = vadd.f32 %v1805, %v216
    %v1809 = vrot.slane %v1601, 6
    %v1811 = vmul.f32 %v1806, %v1809
    %1813 = vrot.lane.b32.xlu0 %v1806, 64
    %v1814 = vpop.permute.xlu0 %1813
    %v1816 = vmul.f32 %v1806, %v1814
    %1818 = vrot.lane.b32.xlu0 %v1816, 32
    %v1819 = vpop.permute.xlu0 %1818
    %v1821 = vadd.f32 %v1811, %v1819
    %v1822 = vtanh.pop %v1821
    %1824 = vrot.lane.b32.xlu0 %v1822, 64
    %v1825 = vpop.permute.xlu0 %1824
    %v1827 = vmul.f32 %v1806, %v1825
    %v1829 = vrot.slane %v1621, 6
    %v1831 = vmul.f32 %v1807, %v1829
    %1833 = vrot.lane.b32.xlu0 %v1807, 64
    %v1834 = vpop.permute.xlu0 %1833
    %v1836 = vmul.f32 %v1807, %v1834
    %1838 = vrot.lane.b32.xlu0 %v1836, 32
    %v1839 = vpop.permute.xlu0 %1838
    %v1841 = vadd.f32 %v1831, %v1839
    %v1842 = vtanh.pop %v1841
    %1844 = vrot.lane.b32.xlu0 %v1842, 64
    %v1845 = vpop.permute.xlu0 %1844
    %v1847 = vmul.f32 %v1807, %v1845
    %1849 = vrot.lane.b32.xlu0 %v1847, 32
    %v1850 = vpop.permute.xlu0 %1849
    %1852 = vst.msk [vmem:[#allocation2 + $0x6] sm:$0xc0] %vm986, %v1850
    %v1854 = vrot.slane %v1827, 6
    %1855 = vrot.lane.b32.xlu0 %v1854, 32
    %v1856 = vpop.permute.xlu0 %1855
    %v1857 = vsel %vm226, %v1856, 0
    %1859 = vmatprep.subr.mxu0 0.0
    %1860 = vmatpush1.msra.mxu0 0.0
    %1861 = vmatprep.subr.mxu0 0.0
    %1862 = vmatpush1.msra.mxu0 0.0
    %1863 = vmatprep.subr.mxu0 0.0
    %1864 = vmatpush1.msra.mxu0 0.0
    %1865 = vmatprep.subr.mxu0 0.0
    %1866 = vmatpush1.msra.mxu0 0.0
    %1867 = vmatprep.subr.mxu0 0.0
    %1868 = vmatpush1.msra.mxu0 0.0
    %1869 = vmatprep.subr.mxu0 0.0
    %1870 = vmatpush1.msra.mxu0 0.0
    %1871 = vmatprep.subr.mxu0 0.0
    %1872 = vmatpush1.msra.mxu0 0.0
    %1873 = vmatprep.subr.mxu0 0.0
    %1874 = vmatpush1.msra.mxu0 0.0
    %1875 = vmatprep.subr.mxu0 0.0
    %1876 = vmatpush1.msra.mxu0 0.0
    %1877 = vmatprep.subr.mxu0 0.0
    %1878 = vmatpush1.msra.mxu0 0.0
    %1879 = vmatprep.subr.mxu0 0.0
    %1880 = vmatpush1.msra.mxu0 0.0
    %1881 = vmatprep.subr.mxu0 0.0
    %1882 = vmatpush1.msra.mxu0 0.0
    %1883 = vmatprep.subr.mxu0 %v188
    %1884 = vmatpush1.msra.mxu0 %v187
    %1885 = vmatprep.subr.mxu0 %v186
    %1886 = vmatpush1.msra.mxu0 %v185
    %1887 = vmatprep.subr.mxu0 %v184
    %1888 = vmatpush1.msra.mxu0 %v183
    %1889 = vmatprep.subr.mxu0 %v182
    %1890 = vmatpush1.msra.mxu0 %v181
    %1891 = vmatprep.subr.mxu0 0.0
    %1892 = vmatpush2.msra.mxu0 0.0
    %1893 = vmatprep.subr.mxu0 0.0
    %1894 = vmatpush2.msra.mxu0 0.0
    %1895 = vmatprep.subr.mxu0 0.0
    %1896 = vmatpush2.msra.mxu0 0.0
    %1897 = vmatprep.subr.mxu0 0.0
    %1898 = vmatpush2.msra.mxu0 0.0
    %1899 = vmatprep.subr.mxu0 0.0
    %1900 = vmatpush2.msra.mxu0 0.0
    %1901 = vmatprep.subr.mxu0 0.0
    %1902 = vmatpush2.msra.mxu0 0.0
    %1903 = vmatprep.subr.mxu0 0.0
    %1904 = vmatpush2.msra.mxu0 0.0
    %1905 = vmatprep.subr.mxu0 0.0
    %1906 = vmatpush2.msra.mxu0 0.0
    %1907 = vmatprep.subr.mxu0 0.0
    %1908 = vmatpush2.msra.mxu0 0.0
    %1909 = vmatprep.subr.mxu0 0.0
    %1910 = vmatpush2.msra.mxu0 0.0
    %1911 = vmatprep.subr.mxu0 0.0
    %1912 = vmatpush2.msra.mxu0 0.0
    %1913 = vmatprep.subr.mxu0 0.0
    %1914 = vmatpush2.msra.mxu0 0.0
    %1915 = vmatprep.subr.mxu0 0.0
    %1916 = vmatpush2.msra.mxu0 0.0
    %1917 = vmatprep.subr.mxu0 0.0
    %1918 = vmatpush2.msra.mxu0 0.0
    %1919 = vmatprep.subr.mxu0 0.0
    %1920 = vmatpush2.msra.mxu0 0.0
    %1921 = vmatprep.subr.mxu0 0.0
    %1922 = vmatpush2.msra.mxu0 0.0
    %1923 = vmatprep.mubr.f32.mxu0 0.0
    %1924 = vmatmul.mubr.f32.gmra.mxu0 %v1857
    %v1925 = vpop.f32.mrf.mxu0
    %v1926 = vpop.f32.mrf.mxu0
    %v1927 = vadd.f32 0.0, %v1926
    %1928 = vdwg.mxu0
    %v1930 = vrot.slane %v1927, 2
    %v1932 = vadd.f32 %v179, %v1930
    %v1933 = vrot.slane %v1847, 6
    %1934 = vrot.lane.b32.xlu0 %v1933, 32
    %v1935 = vpop.permute.xlu0 %1934
    %v1936 = vsel %vm226, %v1935, 0
    %1938 = vmatprep.subr.mxu0 0.0
    %1939 = vmatpush1.msra.mxu0 0.0
    %1940 = vmatprep.subr.mxu0 0.0
    %1941 = vmatpush1.msra.mxu0 0.0
    %1942 = vmatprep.subr.mxu0 0.0
    %1943 = vmatpush1.msra.mxu0 0.0
    %1944 = vmatprep.subr.mxu0 0.0
    %1945 = vmatpush1.msra.mxu0 0.0
    %1946 = vmatprep.subr.mxu0 0.0
    %1947 = vmatpush1.msra.mxu0 0.0
    %1948 = vmatprep.subr.mxu0 0.0
    %1949 = vmatpush1.msra.mxu0 0.0
    %1950 = vmatprep.subr.mxu0 0.0
    %1951 = vmatpush1.msra.mxu0 0.0
    %1952 = vmatprep.subr.mxu0 0.0
    %1953 = vmatpush1.msra.mxu0 0.0
    %1954 = vmatprep.subr.mxu0 0.0
    %1955 = vmatpush1.msra.mxu0 0.0
    %1956 = vmatprep.subr.mxu0 0.0
    %1957 = vmatpush1.msra.mxu0 0.0
    %1958 = vmatprep.subr.mxu0 0.0
    %1959 = vmatpush1.msra.mxu0 0.0
    %1960 = vmatprep.subr.mxu0 0.0
    %1961 = vmatpush1.msra.mxu0 0.0
    %1962 = vmatprep.subr.mxu0 %v196
    %1963 = vmatpush1.msra.mxu0 %v195
    %1964 = vmatprep.subr.mxu0 %v194
    %1965 = vmatpush1.msra.mxu0 %v193
    %1966 = vmatprep.subr.mxu0 %v192
    %1967 = vmatpush1.msra.mxu0 %v191
    %1968 = vmatprep.subr.mxu0 %v190
    %1969 = vmatpush1.msra.mxu0 %v189
    %1970 = vmatprep.subr.mxu0 0.0
    %1971 = vmatpush2.msra.mxu0 0.0
    %1972 = vmatprep.subr.mxu0 0.0
    %1973 = vmatpush2.msra.mxu0 0.0
    %1974 = vmatprep.subr.mxu0 0.0
    %1975 = vmatpush2.msra.mxu0 0.0
    %1976 = vmatprep.subr.mxu0 0.0
    %1977 = vmatpush2.msra.mxu0 0.0
    %1978 = vmatprep.subr.mxu0 0.0
    %1979 = vmatpush2.msra.mxu0 0.0
    %1980 = vmatprep.subr.mxu0 0.0
    %1981 = vmatpush2.msra.mxu0 0.0
    %1982 = vmatprep.subr.mxu0 0.0
    %1983 = vmatpush2.msra.mxu0 0.0
    %1984 = vmatprep.subr.mxu0 0.0
    %1985 = vmatpush2.msra.mxu0 0.0
    %1986 = vmatprep.subr.mxu0 0.0
    %1987 = vmatpush2.msra.mxu0 0.0
    %1988 = vmatprep.subr.mxu0 0.0
    %1989 = vmatpush2.msra.mxu0 0.0
    %1990 = vmatprep.subr.mxu0 0.0
    %1991 = vmatpush2.msra.mxu0 0.0
    %1992 = vmatprep.subr.mxu0 0.0
    %1993 = vmatpush2.msra.mxu0 0.0
    %1994 = vmatprep.subr.mxu0 0.0
    %1995 = vmatpush2.msra.mxu0 0.0
    %1996 = vmatprep.subr.mxu0 0.0
    %1997 = vmatpush2.msra.mxu0 0.0
    %1998 = vmatprep.subr.mxu0 0.0
    %1999 = vmatpush2.msra.mxu0 0.0
    %2000 = vmatprep.subr.mxu0 0.0
    %2001 = vmatpush2.msra.mxu0 0.0
    %2002 = vmatprep.mubr.f32.mxu0 0.0
    %2003 = vmatmul.mubr.f32.gmra.mxu0 %v1936
    %v2004 = vpop.f32.mrf.mxu0
    %v2005 = vpop.f32.mrf.mxu0
    %v2006 = vadd.f32 0.0, %v2005
    %2007 = vdwg.mxu0
    %v2009 = vrot.slane %v2006, 2
    %v2011 = vadd.f32 %v1932, %v2009
    %v2012 = vtanh.pop %v2011
    %v2013 = vmul.f32 %v2012, %v205
    %v2014 = vadd.f32 %v2013, %v216
    %v2015 = vmul.f32 %v2014, %v1841
    %2017 = vrot.lane.b32.xlu0 %v2014, 64
    %v2018 = vpop.permute.xlu0 %2017
    %v2020 = vmul.f32 %v2014, %v2018
    %2022 = vrot.lane.b32.xlu0 %v2020, 32
    %v2023 = vpop.permute.xlu0 %2022
    %v2025 = vadd.f32 %v2015, %v2023
    %v2026 = vtanh.pop %v2025
    %2028 = vrot.lane.b32.xlu0 %v2026, 64
    %v2029 = vpop.permute.xlu0 %2028
    %v2031 = vmul.f32 %v2014, %v2029
    %2033 = vrot.lane.b32.xlu0 %v2031, 32
    %v2034 = vpop.permute.xlu0 %2033
    %2036 = vst.msk [vmem:[#allocation2 + $0x8] sm:$0xc0] %vm986, %v2034
    %v2037 = vld [vmem:[#allocation5] sm:$0xff]
    %v2038 = vld [vmem:[#allocation5 + $0x8] sm:$0xff]
    %v2039 = vld [vmem:[#allocation5 + $0x10] sm:$0xff]
    %v2040 = vld [vmem:[#allocation5 + $0x18] sm:$0xff]
    %v2041 = vld [vmem:[#allocation5 + $0x20] sm:$0x1]
    %v2042 = vld [vmem:[#allocation2] sm:$0xff]
    %v2043 = vld [vmem:[#allocation2 + $0x8] sm:$0xff]
    %v2044 = vlaneseq
    %v2045 = vshrl.u32 %v2044, 7
    %v2046 = vsub.s32 0, %v2045
    %v2047 = vrot.slane %v2041, %v2046
    %v2049 = vsel %vm226, %v2042, 0
    %v2052 = vsel %vm226, %v2043, 0
    %2054 = vmatprep.subr.mxu0 0.0
    %2055 = vmatpush1.msra.mxu0 0.0
    %2056 = vmatprep.subr.mxu0 0.0
    %2057 = vmatpush1.msra.mxu0 0.0
    %2058 = vmatprep.subr.mxu0 0.0
    %2059 = vmatpush1.msra.mxu0 0.0
    %2060 = vmatprep.subr.mxu0 0.0
    %2061 = vmatpush1.msra.mxu0 0.0
    %2062 = vmatprep.subr.mxu0 0.0
    %2063 = vmatpush1.msra.mxu0 0.0
    %2064 = vmatprep.subr.mxu0 0.0
    %2065 = vmatpush1.msra.mxu0 0.0
    %2066 = vmatprep.subr.mxu0 0.0
    %2067 = vmatpush1.msra.mxu0 0.0
    %2068 = vmatprep.subr.mxu0 0.0
    %2069 = vmatpush1.msra.mxu0 0.0
    %2070 = vmatprep.subr.mxu0 0.0
    %2071 = vmatpush1.msra.mxu0 0.0
    %2072 = vmatprep.subr.mxu0 0.0
    %2073 = vmatpush1.msra.mxu0 0.0
    %2074 = vmatprep.subr.mxu0 0.0
    %2075 = vmatpush1.msra.mxu0 0.0
    %2076 = vmatprep.subr.mxu0 0.0
    %2077 = vmatpush1.msra.mxu0 0.0
    %2078 = vmatprep.subr.mxu0 0.0
    %2079 = vmatpush1.msra.mxu0 %v2040
    %2080 = vmatprep.subr.mxu0 0.0
    %2081 = vmatpush1.msra.mxu0 %v2039
    %2082 = vmatprep.subr.mxu0 0.0
    %2083 = vmatpush1.msra.mxu0 %v2038
    %2084 = vmatprep.subr.mxu0 0.0
    %2085 = vmatpush1.msra.mxu0 %v2037
    %2086 = vmatprep.subr.mxu0 0.0
    %2087 = vmatpush2.msra.mxu0 0.0
    %2088 = vmatprep.subr.mxu0 0.0
    %2089 = vmatpush2.msra.mxu0 0.0
    %2090 = vmatprep.subr.mxu0 0.0
    %2091 = vmatpush2.msra.mxu0 0.0
    %2092 = vmatprep.subr.mxu0 0.0
    %2093 = vmatpush2.msra.mxu0 0.0
    %2094 = vmatprep.subr.mxu0 0.0
    %2095 = vmatpush2.msra.mxu0 0.0
    %2096 = vmatprep.subr.mxu0 0.0
    %2097 = vmatpush2.msra.mxu0 0.0
    %2098 = vmatprep.subr.mxu0 0.0
    %2099 = vmatpush2.msra.mxu0 0.0
    %2100 = vmatprep.subr.mxu0 0.0
    %2101 = vmatpush2.msra.mxu0 0.0
    %2102 = vmatprep.subr.mxu0 0.0
    %2103 = vmatpush2.msra.mxu0 0.0
    %2104 = vmatprep.subr.mxu0 0.0
    %2105 = vmatpush2.msra.mxu0 0.0
    %2106 = vmatprep.subr.mxu0 0.0
    %2107 = vmatpush2.msra.mxu0 0.0
    %2108 = vmatprep.subr.mxu0 0.0
    %2109 = vmatpush2.msra.mxu0 0.0
    %2110 = vmatprep.subr.mxu0 0.0
    %2111 = vmatpush2.msra.mxu0 0.0
    %2112 = vmatprep.subr.mxu0 0.0
    %2113 = vmatpush2.msra.mxu0 0.0
    %2114 = vmatprep.subr.mxu0 0.0
    %2115 = vmatpush2.msra.mxu0 0.0
    %2116 = vmatprep.subr.mxu0 0.0
    %2117 = vmatpush2.msra.mxu0 0.0
    %2118 = vmatprep.mubr.f32.mxu0 0.0
    %2119 = vmatmul.mubr.f32.gmra.mxu0 %v2049
    %v2120 = vpop.f32.mrf.mxu0
    %v2121 = vadd.f32 %v2047, %v2120
    %v2122 = vpop.f32.mrf.mxu0
    %2123 = vmatprep.mubr.f32.mxu0 0.0
    %2124 = vmatmul.mubr.f32.gmra.mxu0 %v2052
    %v2125 = vpop.f32.mrf.mxu0
    %v2126 = vadd.f32 %v2047, %v2125
    %v2127 = vpop.f32.mrf.mxu0
    %2128 = vdwg.mxu0
    %2129 = vst [vmem:[%s5] sm:$0xff] %v2121
    %2130 = vst [vmem:[%s5 + $0x8] sm:$0xff] %v2126
    %2131 = vrot.lane.b32.xlu0 %v1827, 32
    %v2132 = vpop.permute.xlu0 %2131
    %2134 = vst.msk [vmem:[%s6 - $0x6] sm:$0xc0] %vm986, %v2132
    %2136 = vrot.lane.b32.xlu0 %v1821, 96
    %v2137 = vpop.permute.xlu0 %2136
    %s2139 = scalar_lea.vmem %s6, 4
    %2140 = vst.msk [vmem:[%s2139 - $0x6] sm:$0xc0] %vm986, %v2137
    %s2141 = scalar_lea.vmem %s6, 2
    %2142 = vst.msk [vmem:[%s2141 - $0x6] sm:$0xc0] %vm986, %v2034
    %2144 = vrot.lane.b32.xlu0 %v2025, 96
    %v2145 = vpop.permute.xlu0 %2144
    %s2147 = scalar_lea.vmem %s6, 6
    %2148 = vst.msk [vmem:[%s2147 - $0x6] sm:$0xc0] %vm986, %v2145
    // Predicated region
    $region30: #{_forward.1} parent=1 // pred_check
      _
    $region31: #{_forward.1} parent=1 // pred_check_branch
      %2150 = sbr.rel (0) target = $region33
    $region32: #{_forward.1} parent=1 // pred_region
      _
    $region33: #{_forward.1} parent=1 // pred_fallthru
      _
    // Predicated region
    $region34: #{_forward.1} parent=1 // pred_check
      _
    $region35: #{_forward.1} parent=1 // pred_check_branch
      %2152 = sbr.rel (0) target = $region37
    $region36: #{_forward.1} parent=1 // pred_region
      _
    $region37: #{_forward.1} parent=1 // pred_fallthru
      _
    // Predicated region
    $region38: #{_forward.1} parent=1 // pred_check
      _
    $region39: #{_forward.1} parent=1 // pred_check_branch
      %2154 = sbr.rel (0) target = $region41
    $region40: #{_forward.1} parent=1 // pred_region
      _
    $region41: #{_forward.1} parent=1 // pred_fallthru
      _
    // Predicated region
    $region42: #{_forward.1} parent=1 // pred_check
      _
    $region43: #{_forward.1} parent=1 // pred_check_branch
      %2156 = sbr.rel (0) target = $region45
    $region44: #{_forward.1} parent=1 // pred_region
      _
    $region45: #{_forward.1} parent=1 // pred_fallthru
      _
    %2157 = vsyncpa [#allocation4], 1
    %2158 = vsyncpa [#allocation6], 1

</llo_original>
